<compile_context>
chip_gen: v7x
topology: tpu7x:2x2x1
jax: 0.10.0
libtpu: 0.0.40
codegen_flags: <defaults>
</compile_context>

<pallas_src>
import functools

import jax
import jax.numpy as jnp
from jax.experimental import pallas as pl
from jax.experimental.pallas import tpu as pltpu

MATMUL_DTYPE = jnp.bfloat16     # MXU input dtype (f32 accumulation everywhere)


def _round_up(n, m):
    return ((n + m - 1) // m) * m


def _row_tile(n, max_tile=256):
    """Row tile for the bulk matmul kernels: multiple of 16 (bf16 sublane
    packing), capped so double-buffered tiles stay far under v7x's 64 MiB VMEM."""
    return min(max_tile, _round_up(n, 16))


def _head_row_tile(n, vocab, budget_bytes=4 << 20):
    """Row tile for the head: keep the double-buffered (tile, V) f32 logits
    block within a small VMEM budget so it also fits v7x (64 MiB VMEM)."""
    t = (budget_bytes // (vocab * 4 * 2)) // 16 * 16
    t = max(16, min(256, t))
    return min(t, _round_up(n, 16))


def _time_chunk(s):
    """Timesteps per recurrence grid step (amortizes ~600-cycle grid overhead)."""
    for t in (64, 32, 16, 8):
        if s % t == 0:
            return t
    return s   # full sequence in one block (block dim == full array dim is legal)


# ----------------------------------------------------------------------------
# 1) Bulk gate projection: (N, In) x (In, H) per gate, row-tiled, "parallel".
#    Per-gate weight slabs keep every output array lane-dense (no slicing a
#    3H-wide vreg at H boundaries).
# ----------------------------------------------------------------------------
def qrnn_gates_kernel(x_ref, wz_ref, wf_ref, wo_ref, bz_ref, bf_ref, bo_ref,
                      fz_ref, omf_ref, o_ref):
    x = x_ref[...]                                                   # bf16 (tn, In)
    z = jnp.tanh(
        jnp.dot(x, wz_ref[...], preferred_element_type=jnp.float32) + bz_ref[0])
    f = jax.nn.sigmoid(
        jnp.dot(x, wf_ref[...], preferred_element_type=jnp.float32) + bf_ref[0])
    o = jax.nn.sigmoid(
        jnp.dot(x, wo_ref[...], preferred_element_type=jnp.float32) + bo_ref[0])
    fz_ref[...] = f * z
    omf_ref[...] = 1.0 - f
    o_ref[...] = o


def qrnn_gates(x2d, wz, wf, wo, bz, bf, bo):
    """x2d: (N, In) bf16, w*: (In, H) bf16, b*: (H,) f32 -> fz, omf, o (N, H) f32."""
    N, In = x2d.shape
    H = wz.shape[1]
    tn = _row_tile(N)
    Np = _round_up(N, tn)
    if Np != N:
        x2d = jnp.pad(x2d, ((0, Np - N), (0, 0)))

    row_spec = pl.BlockSpec((tn, In), lambda i: (i, 0))
    w_spec = pl.BlockSpec((In, H), lambda i: (0, 0))
    b_spec = pl.BlockSpec((1, H), lambda i: (0, 0))
    out_spec = pl.BlockSpec((tn, H), lambda i: (i, 0))

    fz, omf, o = pl.pallas_call(
        qrnn_gates_kernel,
        out_shape=tuple(jax.ShapeDtypeStruct((Np, H), jnp.float32) for _ in range(3)),
        grid_spec=pltpu.PrefetchScalarGridSpec(
            num_scalar_prefetch=0,
            grid=(Np // tn,),
            in_specs=[row_spec, w_spec, w_spec, w_spec, b_spec, b_spec, b_spec],
            out_specs=(out_spec, out_spec, out_spec),
        ),
        compiler_params=pltpu.CompilerParams(
            dimension_semantics=("parallel",)),
    )(x2d, wz, wf, wo, bz.reshape(1, H), bf.reshape(1, H), bo.reshape(1, H))

    if Np != N:
        fz, omf, o = fz[:N], omf[:N], o[:N]
    return fz, omf, o


# ----------------------------------------------------------------------------
# 2) Recurrence (ForgetMult + output gate): elementwise only, time-chunked.
#    c is carried in vregs within a chunk and in a (B, H) VMEM scratch across
#    chunks. grid=(S//T,), "arbitrary".
# ----------------------------------------------------------------------------
def forget_mult_kernel(h0_ref, fz_ref, omf_ref, o_ref, h_ref, c_last_ref, c_scratch):
    @pl.when(pl.program_id(0) == 0)
    def _():
        c_scratch[...] = h0_ref[...]

    c = c_scratch[...]                          # (B, H), f32
    for tt in range(fz_ref.shape[1]):           # static unroll over the time chunk
        c = fz_ref[:, tt, :] + omf_ref[:, tt, :] * c
        h_ref[:, tt, :] = o_ref[:, tt, :] * c
    c_scratch[...] = c
    c_last_ref[...] = c                         # last grid step's value survives


def qrnn_forget_mult(fz, omf, o, h0):
    """fz/omf/o: (B, S, H) f32, h0: (B, H) f32 -> h (B, S, H) f32, c_last (B, H) f32."""
    B, S, H = fz.shape
    T = _time_chunk(S)

    state_spec = pl.BlockSpec((B, H), lambda i: (0, 0))
    seq_spec = pl.BlockSpec((B, T, H), lambda i: (0, i, 0))

    h, c_last = pl.pallas_call(
        forget_mult_kernel,
        out_shape=(jax.ShapeDtypeStruct((B, S, H), jnp.float32),
                   jax.ShapeDtypeStruct((B, H), jnp.float32)),
        grid_spec=pltpu.PrefetchScalarGridSpec(
            num_scalar_prefetch=0,
            grid=(S // T,),
            in_specs=[state_spec, seq_spec, seq_spec, seq_spec],
            out_specs=(seq_spec, state_spec),
            scratch_shapes=[pltpu.VMEM((B, H), jnp.float32)],
        ),
        compiler_params=pltpu.CompilerParams(
            dimension_semantics=("arbitrary",)),
    )(h0, fz, omf, o)
    return h, c_last


# ----------------------------------------------------------------------------
# 3) Head: fc1 -> fc2 -> log_softmax, row-tiled, "parallel".
# ----------------------------------------------------------------------------
def head_kernel(x_ref, w1_ref, b1_ref, w2_ref, b2_ref, out_ref):
    h = jnp.dot(x_ref[...], w1_ref[...],
                preferred_element_type=jnp.float32) + b1_ref[0]
    logits = jnp.dot(h.astype(w2_ref.dtype), w2_ref[...],
                     preferred_element_type=jnp.float32) + b2_ref[0]
    m = jnp.max(logits, axis=-1, keepdims=True)
    s = logits - m
    lse = jnp.log(jnp.sum(jnp.exp(s), axis=-1, keepdims=True))
    out_ref[...] = s - lse


def head(x2d, w1, b1, w2, b2):
    """x2d: (N, H) bf16, w1: (H, F) bf16, w2: (F, V) bf16, b*: f32 -> (N, V) f32."""
    # TODO(synk): for very large vocab, additionally tile V with a two-pass
    # max/LSE instead of holding a full (tile, V) logits block per row tile.
    N, H = x2d.shape
    F = w1.shape[1]
    V = w2.shape[1]
    tn = _head_row_tile(N, V)
    Np = _round_up(N, tn)
    if Np != N:
        x2d = jnp.pad(x2d, ((0, Np - N), (0, 0)))

    out = pl.pallas_call(
        head_kernel,
        out_shape=jax.ShapeDtypeStruct((Np, V), jnp.float32),
        grid_spec=pltpu.PrefetchScalarGridSpec(
            num_scalar_prefetch=0,
            grid=(Np // tn,),
            in_specs=[pl.BlockSpec((tn, H), lambda i: (i, 0)),
                      pl.BlockSpec((H, F), lambda i: (0, 0)),
                      pl.BlockSpec((1, F), lambda i: (0, 0)),
                      pl.BlockSpec((F, V), lambda i: (0, 0)),
                      pl.BlockSpec((1, V), lambda i: (0, 0))],
            out_specs=pl.BlockSpec((tn, V), lambda i: (i, 0)),
        ),
        compiler_params=pltpu.CompilerParams(
            dimension_semantics=("parallel",)),
    )(x2d, w1, b1.reshape(1, F), w2, b2.reshape(1, V))

    if Np != N:
        out = out[:N]
    return out


# ----------------------------------------------------------------------------
# Parameters & full model
# ----------------------------------------------------------------------------
def init_params(key, vocab_size, emb_dim, hidden_dim, num_layers):
    fc_hid = hidden_dim // 5
    keys = jax.random.split(key, 1 + 6 * num_layers + 2)
    ki = iter(keys)
    params = {"embedding":
              jax.random.normal(next(ki), (vocab_size, emb_dim), jnp.float32) * 0.1}
    layers = []
    for l in range(num_layers):
        in_dim = emb_dim if l == 0 else hidden_dim
        scale = 1.0 / jnp.sqrt(in_dim)
        layer = {}
        for g in ("z", "f", "o"):   # per-gate slabs -> lane-dense gate outputs
            layer["w" + g] = jax.random.normal(
                next(ki), (in_dim, hidden_dim), jnp.float32) * scale
            layer["b" + g] = jax.random.normal(
                next(ki), (hidden_dim,), jnp.float32) * 0.01
        layers.append(layer)
    params["qrnn"] = layers
    params["fc1_w"] = jax.random.normal(
        next(ki), (hidden_dim, fc_hid), jnp.float32) * (1.0 / jnp.sqrt(hidden_dim))
    params["fc1_b"] = jnp.zeros((fc_hid,), jnp.float32)
    params["fc2_w"] = jax.random.normal(
        next(ki), (fc_hid, vocab_size), jnp.float32) * (1.0 / jnp.sqrt(fc_hid))
    params["fc2_b"] = jnp.zeros((vocab_size,), jnp.float32)
    return params


def qrnn_model_forward(params, tokens, hidden_state):
    """tokens: (B, S) int32, hidden_state: (B, L, H) f32
       -> (log-probs (B, S, V) f32, next_hidden (B, L, H) f32)."""
    B, S = tokens.shape
    N = B * S

    # embedding lookup (plain JAX gather glue); dropout_in = identity (eval)
    x = jnp.take(params["embedding"], tokens, axis=0)        # (B, S, E), batch-major

    c_lasts = []
    for l, layer in enumerate(params["qrnn"]):
        In = x.shape[-1]
        H = layer["wz"].shape[1]
        fz, omf, o = qrnn_gates(
            x.reshape(N, In).astype(MATMUL_DTYPE),
            layer["wz"].astype(MATMUL_DTYPE),
            layer["wf"].astype(MATMUL_DTYPE),
            layer["wo"].astype(MATMUL_DTYPE),
            layer["bz"], layer["bf"], layer["bo"])
        h, c_last = qrnn_forget_mult(
            fz.reshape(B, S, H), omf.reshape(B, S, H), o.reshape(B, S, H),
            hidden_state[:, l, :])
        x = h                                                # (B, S, H), batch-major
        c_lasts.append(c_last)
    next_hidden = jnp.stack(c_lasts, axis=1)                 # (B, L, H)

    H = x.shape[-1]
    V = params["fc2_w"].shape[1]
    logp = head(x.reshape(N, H).astype(MATMUL_DTYPE),
                params["fc1_w"].astype(MATMUL_DTYPE), params["fc1_b"],
                params["fc2_w"].astype(MATMUL_DTYPE), params["fc2_b"]
                ).reshape(B, S, V)
    # dropout_out: eval mode -> identity
    return logp, next_hidden


# ----------------------------------------------------------------------------
# Pure-JAX reference (same bf16-matmul / f32-accumulate numerics)
# ----------------------------------------------------------------------------
def reference_forward(params, tokens, hidden_state):
    x = jnp.take(params["embedding"], tokens, axis=0)        # (B, S, E)
    c_lasts = []
    for l, layer in enumerate(params["qrnn"]):
        xm = x.astype(MATMUL_DTYPE)

        def proj(w, b):
            return jnp.dot(xm, w.astype(MATMUL_DTYPE),
                           preferred_element_type=jnp.float32) + b

        z = jnp.tanh(proj(layer["wz"], layer["bz"]))
        f = jax.nn.sigmoid(proj(layer["wf"], layer["bf"]))
        o = jax.nn.sigmoid(proj(layer["wo"], layer["bo"]))

        def step(c_prev, zf):
            z_t, f_t = zf
            c_t = f_t * z_t + (1.0 - f_t) * c_prev
            return c_t, c_t

        c_last, C = jax.lax.scan(step, hidden_state[:, l, :],
                                 (jnp.moveaxis(z, 1, 0), jnp.moveaxis(f, 1, 0)))
        x = o * jnp.moveaxis(C, 0, 1)                        # (B, S, H)
        c_lasts.append(c_last)
    next_hidden = jnp.stack(c_lasts, axis=1)                 # (B, L, H)

    h = jnp.dot(x.astype(MATMUL_DTYPE), params["fc1_w"].astype(MATMUL_DTYPE),
                preferred_element_type=jnp.float32) + params["fc1_b"]
    logits = jnp.dot(h.astype(MATMUL_DTYPE), params["fc2_w"].astype(MATMUL_DTYPE),
                     preferred_element_type=jnp.float32) + params["fc2_b"]
    return jax.nn.log_softmax(logits, axis=-1), next_hidden


if __name__ == "__main__":
    vocab_size = 16
    emb_dim = 32
    hidden_dim = 32
    num_layers = 2
    batch = 2
    seq = 8

    key = jax.random.PRNGKey(0)
    k_param, k_tok, k_hid = jax.random.split(key, 3)
    params = init_params(k_param, vocab_size, emb_dim, hidden_dim, num_layers)

    tokens = jax.random.randint(k_tok, (batch, seq), 0, vocab_size, dtype=jnp.int32)
    hidden_state = jax.random.normal(
        k_hid, (batch, num_layers, hidden_dim), jnp.float32) * 0.1

    fwd = jax.jit(functools.partial(qrnn_model_forward, params))
    logp, next_hidden = fwd(tokens, hidden_state)
    jax.block_until_ready((logp, next_hidden))

    ref_logp, ref_hidden = reference_forward(params, tokens, hidden_state)
    assert logp.shape == (batch, seq, vocab_size)
    assert next_hidden.shape == (batch, num_layers, hidden_dim)
    assert jnp.allclose(logp, ref_logp, atol=1e-3, rtol=1e-3), \
        float(jnp.max(jnp.abs(logp - ref_logp)))
    assert jnp.allclose(next_hidden, ref_hidden, atol=1e-3, rtol=1e-3), \
        float(jnp.max(jnp.abs(next_hidden - ref_hidden)))

    print("KERNEL_OK")
</pallas_src>

<mosaic_0001>
module attributes {stable_mosaic.version = 11 : i64} {
  func.func @qrnn_gates_kernel(%arg0: i32, %arg1: memref<16x32xbf16, #tpu.memory_space<vmem>>, %arg2: memref<32x32xbf16, #tpu.memory_space<vmem>>, %arg3: memref<32x32xbf16, #tpu.memory_space<vmem>>, %arg4: memref<32x32xbf16, #tpu.memory_space<vmem>>, %arg5: memref<1x32xf32, #tpu.memory_space<vmem>>, %arg6: memref<1x32xf32, #tpu.memory_space<vmem>>, %arg7: memref<1x32xf32, #tpu.memory_space<vmem>>, %arg8: memref<16x32xf32, #tpu.memory_space<vmem>>, %arg9: memref<16x32xf32, #tpu.memory_space<vmem>>, %arg10: memref<16x32xf32, #tpu.memory_space<vmem>>) attributes {dimension_semantics = [#tpu.dimension_semantics<parallel>], iteration_bounds = array<i64: 1>, scalar_prefetch = 0 : i64, scratch_operands = 0 : i64, tpu.core_type = #tpu.core_type<tc>, window_params = [{transform_indices = @transform_0, window_bounds = array<i64: 16, 32>}, {pipeline_mode = #tpu.pipeline_mode<synchronous>, transform_indices = @transform_1, window_bounds = array<i64: 32, 32>}, {pipeline_mode = #tpu.pipeline_mode<synchronous>, transform_indices = @transform_2, window_bounds = array<i64: 32, 32>}, {pipeline_mode = #tpu.pipeline_mode<synchronous>, transform_indices = @transform_3, window_bounds = array<i64: 32, 32>}, {pipeline_mode = #tpu.pipeline_mode<synchronous>, transform_indices = @transform_4, window_bounds = array<i64: 1, 32>}, {pipeline_mode = #tpu.pipeline_mode<synchronous>, transform_indices = @transform_5, window_bounds = array<i64: 1, 32>}, {pipeline_mode = #tpu.pipeline_mode<synchronous>, transform_indices = @transform_6, window_bounds = array<i64: 1, 32>}, {transform_indices = @transform_7, window_bounds = array<i64: 16, 32>}, {transform_indices = @transform_8, window_bounds = array<i64: 16, 32>}, {transform_indices = @transform_9, window_bounds = array<i64: 16, 32>}]} {
    %c0 = arith.constant 0 : index
    %c0_0 = arith.constant 0 : index
    %0 = vector.load %arg1[%c0, %c0_0] : memref<16x32xbf16, #tpu.memory_space<vmem>>, vector<16x32xbf16>
    %c0_1 = arith.constant 0 : index
    %c0_2 = arith.constant 0 : index
    %1 = vector.load %arg2[%c0_1, %c0_2] : memref<32x32xbf16, #tpu.memory_space<vmem>>, vector<32x32xbf16>
    %cst = arith.constant dense<0.000000e+00> : vector<16x32xf32>
    %2 = tpu.matmul %0, %1, %cst {dimension_numbers = #tpu.dot_dimension_numbers<[1], [0], [0], [1], [0, 0, 1, 1], [], []>} : vector<16x32xbf16>, vector<32x32xbf16>, vector<16x32xf32> -> vector<16x32xf32>
    %c0_3 = arith.constant 0 : index
    %c0_4 = arith.constant 0 : index
    %3 = vector.load %arg5[%c0_3, %c0_4] : memref<1x32xf32, #tpu.memory_space<vmem>>, vector<1x32xf32>
    %4 = vector.shape_cast %3 : vector<1x32xf32> to vector<32xf32>
    %5 = vector.shape_cast %4 : vector<32xf32> to vector<1x32xf32>
    %6 = vector.broadcast %5 : vector<1x32xf32> to vector<16x32xf32>
    %7 = arith.addf %2, %6 : vector<16x32xf32>
    %8 = math.tanh %7 : vector<16x32xf32>
    %c0_5 = arith.constant 0 : index
    %c0_6 = arith.constant 0 : index
    %9 = vector.load %arg3[%c0_5, %c0_6] : memref<32x32xbf16, #tpu.memory_space<vmem>>, vector<32x32xbf16>
    %cst_7 = arith.constant dense<0.000000e+00> : vector<16x32xf32>
    %10 = tpu.matmul %0, %9, %cst_7 {dimension_numbers = #tpu.dot_dimension_numbers<[1], [0], [0], [1], [0, 0, 1, 1], [], []>} : vector<16x32xbf16>, vector<32x32xbf16>, vector<16x32xf32> -> vector<16x32xf32>
    %c0_8 = arith.constant 0 : index
    %c0_9 = arith.constant 0 : index
    %11 = vector.load %arg6[%c0_8, %c0_9] : memref<1x32xf32, #tpu.memory_space<vmem>>, vector<1x32xf32>
    %12 = vector.shape_cast %11 : vector<1x32xf32> to vector<32xf32>
    %13 = vector.shape_cast %12 : vector<32xf32> to vector<1x32xf32>
    %14 = vector.broadcast %13 : vector<1x32xf32> to vector<16x32xf32>
    %15 = arith.addf %10, %14 : vector<16x32xf32>
    %16 = arith.negf %15 : vector<16x32xf32>
    %17 = math.exp %16 : vector<16x32xf32>
    %cst_10 = arith.constant 1.000000e+00 : f32
    %18 = vector.broadcast %cst_10 : f32 to vector<16x32xf32>
    %19 = arith.addf %18, %17 : vector<16x32xf32>
    %20 = arith.divf %18, %19 : vector<16x32xf32>
    %c0_11 = arith.constant 0 : index
    %c0_12 = arith.constant 0 : index
    %21 = vector.load %arg4[%c0_11, %c0_12] : memref<32x32xbf16, #tpu.memory_space<vmem>>, vector<32x32xbf16>
    %cst_13 = arith.constant dense<0.000000e+00> : vector<16x32xf32>
    %22 = tpu.matmul %0, %21, %cst_13 {dimension_numbers = #tpu.dot_dimension_numbers<[1], [0], [0], [1], [0, 0, 1, 1], [], []>} : vector<16x32xbf16>, vector<32x32xbf16>, vector<16x32xf32> -> vector<16x32xf32>
    %c0_14 = arith.constant 0 : index
    %c0_15 = arith.constant 0 : index
    %23 = vector.load %arg7[%c0_14, %c0_15] : memref<1x32xf32, #tpu.memory_space<vmem>>, vector<1x32xf32>
    %24 = vector.shape_cast %23 : vector<1x32xf32> to vector<32xf32>
    %25 = vector.shape_cast %24 : vector<32xf32> to vector<1x32xf32>
    %26 = vector.broadcast %25 : vector<1x32xf32> to vector<16x32xf32>
    %27 = arith.addf %22, %26 : vector<16x32xf32>
    %28 = arith.negf %27 : vector<16x32xf32>
    %29 = math.exp %28 : vector<16x32xf32>
    %cst_16 = arith.constant 1.000000e+00 : f32
    %30 = vector.broadcast %cst_16 : f32 to vector<16x32xf32>
    %31 = arith.addf %30, %29 : vector<16x32xf32>
    %32 = arith.divf %30, %31 : vector<16x32xf32>
    %33 = arith.mulf %20, %8 : vector<16x32xf32>
    %c0_17 = arith.constant 0 : index
    %c0_18 = arith.constant 0 : index
    %34 = vector.load %arg8[%c0_17, %c0_18] : memref<16x32xf32, #tpu.memory_space<vmem>>, vector<16x32xf32>
    tpu.vector_store %arg8[%c0_17, %c0_18], %33 {strides = array<i32>} : memref<16x32xf32, #tpu.memory_space<vmem>>, vector<16x32xf32>,
    %cst_19 = arith.constant 1.000000e+00 : f32
    %35 = vector.broadcast %cst_19 : f32 to vector<16x32xf32>
    %36 = arith.subf %35, %20 : vector<16x32xf32>
    %c0_20 = arith.constant 0 : index
    %c0_21 = arith.constant 0 : index
    %37 = vector.load %arg9[%c0_20, %c0_21] : memref<16x32xf32, #tpu.memory_space<vmem>>, vector<16x32xf32>
    tpu.vector_store %arg9[%c0_20, %c0_21], %36 {strides = array<i32>} : memref<16x32xf32, #tpu.memory_space<vmem>>, vector<16x32xf32>,
    %c0_22 = arith.constant 0 : index
    %c0_23 = arith.constant 0 : index
    %38 = vector.load %arg10[%c0_22, %c0_23] : memref<16x32xf32, #tpu.memory_space<vmem>>, vector<16x32xf32>
    tpu.vector_store %arg10[%c0_22, %c0_23], %32 {strides = array<i32>} : memref<16x32xf32, #tpu.memory_space<vmem>>, vector<16x32xf32>,
    return
  }
  func.func @transform_0(%arg0: i32) -> (i32, i32) {
    %c0_i32 = arith.constant 0 : i32
    %c0_i32_0 = arith.constant 0 : i32
    return %arg0, %c0_i32 : i32, i32
  }
  func.func @transform_1(%arg0: i32) -> (i32, i32) {
    %c0_i32 = arith.constant 0 : i32
    %c0_i32_0 = arith.constant 0 : i32
    %c0_i32_1 = arith.constant 0 : i32
    return %c0_i32, %c0_i32_0 : i32, i32
  }
  func.func @transform_2(%arg0: i32) -> (i32, i32) {
    %c0_i32 = arith.constant 0 : i32
    %c0_i32_0 = arith.constant 0 : i32
    %c0_i32_1 = arith.constant 0 : i32
    return %c0_i32, %c0_i32_0 : i32, i32
  }
  func.func @transform_3(%arg0: i32) -> (i32, i32) {
    %c0_i32 = arith.constant 0 : i32
    %c0_i32_0 = arith.constant 0 : i32
    %c0_i32_1 = arith.constant 0 : i32
    return %c0_i32, %c0_i32_0 : i32, i32
  }
  func.func @transform_4(%arg0: i32) -> (i32, i32) {
    %c0_i32 = arith.constant 0 : i32
    %c0_i32_0 = arith.constant 0 : i32
    %c0_i32_1 = arith.constant 0 : i32
    return %c0_i32, %c0_i32_0 : i32, i32
  }
  func.func @transform_5(%arg0: i32) -> (i32, i32) {
    %c0_i32 = arith.constant 0 : i32
    %c0_i32_0 = arith.constant 0 : i32
    %c0_i32_1 = arith.constant 0 : i32
    return %c0_i32, %c0_i32_0 : i32, i32
  }
  func.func @transform_6(%arg0: i32) -> (i32, i32) {
    %c0_i32 = arith.constant 0 : i32
    %c0_i32_0 = arith.constant 0 : i32
    %c0_i32_1 = arith.constant 0 : i32
    return %c0_i32, %c0_i32_0 : i32, i32
  }
  func.func @transform_7(%arg0: i32) -> (i32, i32) {
    %c0_i32 = arith.constant 0 : i32
    %c0_i32_0 = arith.constant 0 : i32
    return %arg0, %c0_i32 : i32, i32
  }
  func.func @transform_8(%arg0: i32) -> (i32, i32) {
    %c0_i32 = arith.constant 0 : i32
    %c0_i32_0 = arith.constant 0 : i32
    return %arg0, %c0_i32 : i32, i32
  }
  func.func @transform_9(%arg0: i32) -> (i32, i32) {
    %c0_i32 = arith.constant 0 : i32
    %c0_i32_0 = arith.constant 0 : i32
    return %arg0, %c0_i32 : i32, i32
  }
}

module attributes {stable_mosaic.version = 11 : i64} {
  func.func @forget_mult_kernel(%arg0: i32, %arg1: memref<2x32xf32, #tpu.memory_space<vmem>>, %arg2: memref<2x8x32xf32, #tpu.memory_space<vmem>>, %arg3: memref<2x8x32xf32, #tpu.memory_space<vmem>>, %arg4: memref<2x8x32xf32, #tpu.memory_space<vmem>>, %arg5: memref<2x8x32xf32, #tpu.memory_space<vmem>>, %arg6: memref<2x32xf32, #tpu.memory_space<vmem>>, %arg7: memref<2x32xf32, #tpu.memory_space<vmem>>) attributes {dimension_semantics = [#tpu.dimension_semantics<arbitrary>], iteration_bounds = array<i64: 1>, scalar_prefetch = 0 : i64, scratch_operands = 1 : i64, tpu.core_type = #tpu.core_type<tc>, window_params = [{pipeline_mode = #tpu.pipeline_mode<synchronous>, transform_indices = @transform_0, window_bounds = array<i64: 2, 32>}, {transform_indices = @transform_1, window_bounds = array<i64: 2, 8, 32>}, {transform_indices = @transform_2, window_bounds = array<i64: 2, 8, 32>}, {transform_indices = @transform_3, window_bounds = array<i64: 2, 8, 32>}, {transform_indices = @transform_4, window_bounds = array<i64: 2, 8, 32>}, {pipeline_mode = #tpu.pipeline_mode<synchronous>, transform_indices = @transform_5, window_bounds = array<i64: 2, 32>}]} {
    %c0_i32 = arith.constant 0 : i32
    %0 = arith.cmpi eq, %arg0, %c0_i32 : i32
    %1 = arith.extui %0 : i1 to i32
    %c0_i32_0 = arith.constant 0 : i32
    %2 = arith.cmpi ne, %1, %c0_i32_0 : i32
    scf.if %2 {
      %c0_95 = arith.constant 0 : index
      %c0_96 = arith.constant 0 : index
      %102 = vector.load %arg1[%c0_95, %c0_96] : memref<2x32xf32, #tpu.memory_space<vmem>>, vector<2x32xf32>
      %c0_97 = arith.constant 0 : index
      %c0_98 = arith.constant 0 : index
      %103 = vector.load %arg7[%c0_97, %c0_98] : memref<2x32xf32, #tpu.memory_space<vmem>>, vector<2x32xf32>
      tpu.vector_store %arg7[%c0_97, %c0_98], %102 {strides = array<i32>} : memref<2x32xf32, #tpu.memory_space<vmem>>, vector<2x32xf32>,
    } else {
    }
    %c0 = arith.constant 0 : index
    %c0_1 = arith.constant 0 : index
    %3 = vector.load %arg7[%c0, %c0_1] : memref<2x32xf32, #tpu.memory_space<vmem>>, vector<2x32xf32>
    %c0_2 = arith.constant 0 : index
    %c0_3 = arith.constant 0 : index
    %c0_4 = arith.constant 0 : index
    %4 = vector.load %arg2[%c0_2, %c0_3, %c0_4] : memref<2x8x32xf32, #tpu.memory_space<vmem>>, vector<2x1x32xf32>
    %5 = vector.shape_cast %4 : vector<2x1x32xf32> to vector<2x32xf32>
    %c0_5 = arith.constant 0 : index
    %c0_6 = arith.constant 0 : index
    %c0_7 = arith.constant 0 : index
    %6 = vector.load %arg3[%c0_5, %c0_6, %c0_7] : memref<2x8x32xf32, #tpu.memory_space<vmem>>, vector<2x1x32xf32>
    %7 = vector.shape_cast %6 : vector<2x1x32xf32> to vector<2x32xf32>
    %8 = arith.mulf %7, %3 : vector<2x32xf32>
    %9 = arith.addf %5, %8 : vector<2x32xf32>
    %c0_8 = arith.constant 0 : index
    %c0_9 = arith.constant 0 : index
    %c0_10 = arith.constant 0 : index
    %10 = vector.load %arg4[%c0_8, %c0_9, %c0_10] : memref<2x8x32xf32, #tpu.memory_space<vmem>>, vector<2x1x32xf32>
    %11 = vector.shape_cast %10 : vector<2x1x32xf32> to vector<2x32xf32>
    %12 = arith.mulf %11, %9 : vector<2x32xf32>
    %c0_11 = arith.constant 0 : index
    %c0_12 = arith.constant 0 : index
    %c0_13 = arith.constant 0 : index
    %13 = vector.load %arg5[%c0_11, %c0_12, %c0_13] : memref<2x8x32xf32, #tpu.memory_space<vmem>>, vector<2x1x32xf32>
    %14 = vector.shape_cast %13 : vector<2x1x32xf32> to vector<2x32xf32>
    %15 = vector.shape_cast %12 : vector<2x32xf32> to vector<2x1x32xf32>
    tpu.vector_store %arg5[%c0_11, %c0_12, %c0_13], %15 {strides = array<i32>} : memref<2x8x32xf32, #tpu.memory_space<vmem>>, vector<2x1x32xf32>,
    %c0_14 = arith.constant 0 : index
    %c1 = arith.constant 1 : index
    %c0_15 = arith.constant 0 : index
    %16 = vector.load %arg2[%c0_14, %c1, %c0_15] : memref<2x8x32xf32, #tpu.memory_space<vmem>>, vector<2x1x32xf32>
    %17 = vector.shape_cast %16 : vector<2x1x32xf32> to vector<2x32xf32>
    %c0_16 = arith.constant 0 : index
    %c1_17 = arith.constant 1 : index
    %c0_18 = arith.constant 0 : index
    %18 = vector.load %arg3[%c0_16, %c1_17, %c0_18] : memref<2x8x32xf32, #tpu.memory_space<vmem>>, vector<2x1x32xf32>
    %19 = vector.shape_cast %18 : vector<2x1x32xf32> to vector<2x32xf32>
    %20 = arith.mulf %19, %9 : vector<2x32xf32>
    %21 = arith.addf %17, %20 : vector<2x32xf32>
    %c0_19 = arith.constant 0 : index
    %c1_20 = arith.constant 1 : index
    %c0_21 = arith.constant 0 : index
    %22 = vector.load %arg4[%c0_19, %c1_20, %c0_21] : memref<2x8x32xf32, #tpu.memory_space<vmem>>, vector<2x1x32xf32>
    %23 = vector.shape_cast %22 : vector<2x1x32xf32> to vector<2x32xf32>
    %24 = arith.mulf %23, %21 : vector<2x32xf32>
    %c0_22 = arith.constant 0 : index
    %c1_23 = arith.constant 1 : index
    %c0_24 = arith.constant 0 : index
    %25 = vector.load %arg5[%c0_22, %c1_23, %c0_24] : memref<2x8x32xf32, #tpu.memory_space<vmem>>, vector<2x1x32xf32>
    %26 = vector.shape_cast %25 : vector<2x1x32xf32> to vector<2x32xf32>
    %27 = vector.shape_cast %24 : vector<2x32xf32> to vector<2x1x32xf32>
    tpu.vector_store %arg5[%c0_22, %c1_23, %c0_24], %27 {strides = array<i32>} : memref<2x8x32xf32, #tpu.memory_space<vmem>>, vector<2x1x32xf32>,
    %c0_25 = arith.constant 0 : index
    %c2 = arith.constant 2 : index
    %c0_26 = arith.constant 0 : index
    %28 = vector.load %arg2[%c0_25, %c2, %c0_26] : memref<2x8x32xf32, #tpu.memory_space<vmem>>, vector<2x1x32xf32>
    %29 = vector.shape_cast %28 : vector<2x1x32xf32> to vector<2x32xf32>
    %c0_27 = arith.constant 0 : index
    %c2_28 = arith.constant 2 : index
    %c0_29 = arith.constant 0 : index
    %30 = vector.load %arg3[%c0_27, %c2_28, %c0_29] : memref<2x8x32xf32, #tpu.memory_space<vmem>>, vector<2x1x32xf32>
    %31 = vector.shape_cast %30 : vector<2x1x32xf32> to vector<2x32xf32>
    %32 = arith.mulf %31, %21 : vector<2x32xf32>
    %33 = arith.addf %29, %32 : vector<2x32xf32>
    %c0_30 = arith.constant 0 : index
    %c2_31 = arith.constant 2 : index
    %c0_32 = arith.constant 0 : index
    %34 = vector.load %arg4[%c0_30, %c2_31, %c0_32] : memref<2x8x32xf32, #tpu.memory_space<vmem>>, vector<2x1x32xf32>
    %35 = vector.shape_cast %34 : vector<2x1x32xf32> to vector<2x32xf32>
    %36 = arith.mulf %35, %33 : vector<2x32xf32>
    %c0_33 = arith.constant 0 : index
    %c2_34 = arith.constant 2 : index
    %c0_35 = arith.constant 0 : index
    %37 = vector.load %arg5[%c0_33, %c2_34, %c0_35] : memref<2x8x32xf32, #tpu.memory_space<vmem>>, vector<2x1x32xf32>
    %38 = vector.shape_cast %37 : vector<2x1x32xf32> to vector<2x32xf32>
    %39 = vector.shape_cast %36 : vector<2x32xf32> to vector<2x1x32xf32>
    tpu.vector_store %arg5[%c0_33, %c2_34, %c0_35], %39 {strides = array<i32>} : memref<2x8x32xf32, #tpu.memory_space<vmem>>, vector<2x1x32xf32>,
    %c0_36 = arith.constant 0 : index
    %c3 = arith.constant 3 : index
    %c0_37 = arith.constant 0 : index
    %40 = vector.load %arg2[%c0_36, %c3, %c0_37] : memref<2x8x32xf32, #tpu.memory_space<vmem>>, vector<2x1x32xf32>
    %41 = vector.shape_cast %40 : vector<2x1x32xf32> to vector<2x32xf32>
    %c0_38 = arith.constant 0 : index
    %c3_39 = arith.constant 3 : index
    %c0_40 = arith.constant 0 : index
    %42 = vector.load %arg3[%c0_38, %c3_39, %c0_40] : memref<2x8x32xf32, #tpu.memory_space<vmem>>, vector<2x1x32xf32>
    %43 = vector.shape_cast %42 : vector<2x1x32xf32> to vector<2x32xf32>
    %44 = arith.mulf %43, %33 : vector<2x32xf32>
    %45 = arith.addf %41, %44 : vector<2x32xf32>
    %c0_41 = arith.constant 0 : index
    %c3_42 = arith.constant 3 : index
    %c0_43 = arith.constant 0 : index
    %46 = vector.load %arg4[%c0_41, %c3_42, %c0_43] : memref<2x8x32xf32, #tpu.memory_space<vmem>>, vector<2x1x32xf32>
    %47 = vector.shape_cast %46 : vector<2x1x32xf32> to vector<2x32xf32>
    %48 = arith.mulf %47, %45 : vector<2x32xf32>
    %c0_44 = arith.constant 0 : index
    %c3_45 = arith.constant 3 : index
    %c0_46 = arith.constant 0 : index
    %49 = vector.load %arg5[%c0_44, %c3_45, %c0_46] : memref<2x8x32xf32, #tpu.memory_space<vmem>>, vector<2x1x32xf32>
    %50 = vector.shape_cast %49 : vector<2x1x32xf32> to vector<2x32xf32>
    %51 = vector.shape_cast %48 : vector<2x32xf32> to vector<2x1x32xf32>
    tpu.vector_store %arg5[%c0_44, %c3_45, %c0_46], %51 {strides = array<i32>} : memref<2x8x32xf32, #tpu.memory_space<vmem>>, vector<2x1x32xf32>,
    %c0_47 = arith.constant 0 : index
    %c4 = arith.constant 4 : index
    %c0_48 = arith.constant 0 : index
    %52 = vector.load %arg2[%c0_47, %c4, %c0_48] : memref<2x8x32xf32, #tpu.memory_space<vmem>>, vector<2x1x32xf32>
    %53 = vector.shape_cast %52 : vector<2x1x32xf32> to vector<2x32xf32>
    %c0_49 = arith.constant 0 : index
    %c4_50 = arith.constant 4 : index
    %c0_51 = arith.constant 0 : index
    %54 = vector.load %arg3[%c0_49, %c4_50, %c0_51] : memref<2x8x32xf32, #tpu.memory_space<vmem>>, vector<2x1x32xf32>
    %55 = vector.shape_cast %54 : vector<2x1x32xf32> to vector<2x32xf32>
    %56 = arith.mulf %55, %45 : vector<2x32xf32>
    %57 = arith.addf %53, %56 : vector<2x32xf32>
    %c0_52 = arith.constant 0 : index
    %c4_53 = arith.constant 4 : index
    %c0_54 = arith.constant 0 : index
    %58 = vector.load %arg4[%c0_52, %c4_53, %c0_54] : memref<2x8x32xf32, #tpu.memory_space<vmem>>, vector<2x1x32xf32>
    %59 = vector.shape_cast %58 : vector<2x1x32xf32> to vector<2x32xf32>
    %60 = arith.mulf %59, %57 : vector<2x32xf32>
    %c0_55 = arith.constant 0 : index
    %c4_56 = arith.constant 4 : index
    %c0_57 = arith.constant 0 : index
    %61 = vector.load %arg5[%c0_55, %c4_56, %c0_57] : memref<2x8x32xf32, #tpu.memory_space<vmem>>, vector<2x1x32xf32>
    %62 = vector.shape_cast %61 : vector<2x1x32xf32> to vector<2x32xf32>
    %63 = vector.shape_cast %60 : vector<2x32xf32> to vector<2x1x32xf32>
    tpu.vector_store %arg5[%c0_55, %c4_56, %c0_57], %63 {strides = array<i32>} : memref<2x8x32xf32, #tpu.memory_space<vmem>>, vector<2x1x32xf32>,
    %c0_58 = arith.constant 0 : index
    %c5 = arith.constant 5 : index
    %c0_59 = arith.constant 0 : index
    %64 = vector.load %arg2[%c0_58, %c5, %c0_59] : memref<2x8x32xf32, #tpu.memory_space<vmem>>, vector<2x1x32xf32>
    %65 = vector.shape_cast %64 : vector<2x1x32xf32> to vector<2x32xf32>
    %c0_60 = arith.constant 0 : index
    %c5_61 = arith.constant 5 : index
    %c0_62 = arith.constant 0 : index
    %66 = vector.load %arg3[%c0_60, %c5_61, %c0_62] : memref<2x8x32xf32, #tpu.memory_space<vmem>>, vector<2x1x32xf32>
    %67 = vector.shape_cast %66 : vector<2x1x32xf32> to vector<2x32xf32>
    %68 = arith.mulf %67, %57 : vector<2x32xf32>
    %69 = arith.addf %65, %68 : vector<2x32xf32>
    %c0_63 = arith.constant 0 : index
    %c5_64 = arith.constant 5 : index
    %c0_65 = arith.constant 0 : index
    %70 = vector.load %arg4[%c0_63, %c5_64, %c0_65] : memref<2x8x32xf32, #tpu.memory_space<vmem>>, vector<2x1x32xf32>
    %71 = vector.shape_cast %70 : vector<2x1x32xf32> to vector<2x32xf32>
    %72 = arith.mulf %71, %69 : vector<2x32xf32>
    %c0_66 = arith.constant 0 : index
    %c5_67 = arith.constant 5 : index
    %c0_68 = arith.constant 0 : index
    %73 = vector.load %arg5[%c0_66, %c5_67, %c0_68] : memref<2x8x32xf32, #tpu.memory_space<vmem>>, vector<2x1x32xf32>
    %74 = vector.shape_cast %73 : vector<2x1x32xf32> to vector<2x32xf32>
    %75 = vector.shape_cast %72 : vector<2x32xf32> to vector<2x1x32xf32>
    tpu.vector_store %arg5[%c0_66, %c5_67, %c0_68], %75 {strides = array<i32>} : memref<2x8x32xf32, #tpu.memory_space<vmem>>, vector<2x1x32xf32>,
    %c0_69 = arith.constant 0 : index
    %c6 = arith.constant 6 : index
    %c0_70 = arith.constant 0 : index
    %76 = vector.load %arg2[%c0_69, %c6, %c0_70] : memref<2x8x32xf32, #tpu.memory_space<vmem>>, vector<2x1x32xf32>
    %77 = vector.shape_cast %76 : vector<2x1x32xf32> to vector<2x32xf32>
    %c0_71 = arith.constant 0 : index
    %c6_72 = arith.constant 6 : index
    %c0_73 = arith.constant 0 : index
    %78 = vector.load %arg3[%c0_71, %c6_72, %c0_73] : memref<2x8x32xf32, #tpu.memory_space<vmem>>, vector<2x1x32xf32>
    %79 = vector.shape_cast %78 : vector<2x1x32xf32> to vector<2x32xf32>
    %80 = arith.mulf %79, %69 : vector<2x32xf32>
    %81 = arith.addf %77, %80 : vector<2x32xf32>
    %c0_74 = arith.constant 0 : index
    %c6_75 = arith.constant 6 : index
    %c0_76 = arith.constant 0 : index
    %82 = vector.load %arg4[%c0_74, %c6_75, %c0_76] : memref<2x8x32xf32, #tpu.memory_space<vmem>>, vector<2x1x32xf32>
    %83 = vector.shape_cast %82 : vector<2x1x32xf32> to vector<2x32xf32>
    %84 = arith.mulf %83, %81 : vector<2x32xf32>
    %c0_77 = arith.constant 0 : index
    %c6_78 = arith.constant 6 : index
    %c0_79 = arith.constant 0 : index
    %85 = vector.load %arg5[%c0_77, %c6_78, %c0_79] : memref<2x8x32xf32, #tpu.memory_space<vmem>>, vector<2x1x32xf32>
    %86 = vector.shape_cast %85 : vector<2x1x32xf32> to vector<2x32xf32>
    %87 = vector.shape_cast %84 : vector<2x32xf32> to vector<2x1x32xf32>
    tpu.vector_store %arg5[%c0_77, %c6_78, %c0_79], %87 {strides = array<i32>} : memref<2x8x32xf32, #tpu.memory_space<vmem>>, vector<2x1x32xf32>,
    %c0_80 = arith.constant 0 : index
    %c7 = arith.constant 7 : index
    %c0_81 = arith.constant 0 : index
    %88 = vector.load %arg2[%c0_80, %c7, %c0_81] : memref<2x8x32xf32, #tpu.memory_space<vmem>>, vector<2x1x32xf32>
    %89 = vector.shape_cast %88 : vector<2x1x32xf32> to vector<2x32xf32>
    %c0_82 = arith.constant 0 : index
    %c7_83 = arith.constant 7 : index
    %c0_84 = arith.constant 0 : index
    %90 = vector.load %arg3[%c0_82, %c7_83, %c0_84] : memref<2x8x32xf32, #tpu.memory_space<vmem>>, vector<2x1x32xf32>
    %91 = vector.shape_cast %90 : vector<2x1x32xf32> to vector<2x32xf32>
    %92 = arith.mulf %91, %81 : vector<2x32xf32>
    %93 = arith.addf %89, %92 : vector<2x32xf32>
    %c0_85 = arith.constant 0 : index
    %c7_86 = arith.constant 7 : index
    %c0_87 = arith.constant 0 : index
    %94 = vector.load %arg4[%c0_85, %c7_86, %c0_87] : memref<2x8x32xf32, #tpu.memory_space<vmem>>, vector<2x1x32xf32>
    %95 = vector.shape_cast %94 : vector<2x1x32xf32> to vector<2x32xf32>
    %96 = arith.mulf %95, %93 : vector<2x32xf32>
    %c0_88 = arith.constant 0 : index
    %c7_89 = arith.constant 7 : index
    %c0_90 = arith.constant 0 : index
    %97 = vector.load %arg5[%c0_88, %c7_89, %c0_90] : memref<2x8x32xf32, #tpu.memory_space<vmem>>, vector<2x1x32xf32>
    %98 = vector.shape_cast %97 : vector<2x1x32xf32> to vector<2x32xf32>
    %99 = vector.shape_cast %96 : vector<2x32xf32> to vector<2x1x32xf32>
    tpu.vector_store %arg5[%c0_88, %c7_89, %c0_90], %99 {strides = array<i32>} : memref<2x8x32xf32, #tpu.memory_space<vmem>>, vector<2x1x32xf32>,
    %c0_91 = arith.constant 0 : index
    %c0_92 = arith.constant 0 : index
    %100 = vector.load %arg7[%c0_91, %c0_92] : memref<2x32xf32, #tpu.memory_space<vmem>>, vector<2x32xf32>
    tpu.vector_store %arg7[%c0_91, %c0_92], %93 {strides = array<i32>} : memref<2x32xf32, #tpu.memory_space<vmem>>, vector<2x32xf32>,
    %c0_93 = arith.constant 0 : index
    %c0_94 = arith.constant 0 : index
    %101 = vector.load %arg6[%c0_93, %c0_94] : memref<2x32xf32, #tpu.memory_space<vmem>>, vector<2x32xf32>
    tpu.vector_store %arg6[%c0_93, %c0_94], %93 {strides = array<i32>} : memref<2x32xf32, #tpu.memory_space<vmem>>, vector<2x32xf32>,
    return
  }
  func.func @transform_0(%arg0: i32) -> (i32, i32) {
    %c0_i32 = arith.constant 0 : i32
    %c0_i32_0 = arith.constant 0 : i32
    %c0_i32_1 = arith.constant 0 : i32
    return %c0_i32, %c0_i32_0 : i32, i32
  }
  func.func @transform_1(%arg0: i32) -> (i32, i32, i32) {
    %c0_i32 = arith.constant 0 : i32
    %c0_i32_0 = arith.constant 0 : i32
    %c0_i32_1 = arith.constant 0 : i32
    return %c0_i32, %arg0, %c0_i32_0 : i32, i32, i32
  }
  func.func @transform_2(%arg0: i32) -> (i32, i32, i32) {
    %c0_i32 = arith.constant 0 : i32
    %c0_i32_0 = arith.constant 0 : i32
    %c0_i32_1 = arith.constant 0 : i32
    return %c0_i32, %arg0, %c0_i32_0 : i32, i32, i32
  }
  func.func @transform_3(%arg0: i32) -> (i32, i32, i32) {
    %c0_i32 = arith.constant 0 : i32
    %c0_i32_0 = arith.constant 0 : i32
    %c0_i32_1 = arith.constant 0 : i32
    return %c0_i32, %arg0, %c0_i32_0 : i32, i32, i32
  }
  func.func @transform_4(%arg0: i32) -> (i32, i32, i32) {
    %c0_i32 = arith.constant 0 : i32
    %c0_i32_0 = arith.constant 0 : i32
    %c0_i32_1 = arith.constant 0 : i32
    return %c0_i32, %arg0, %c0_i32_0 : i32, i32, i32
  }
  func.func @transform_5(%arg0: i32) -> (i32, i32) {
    %c0_i32 = arith.constant 0 : i32
    %c0_i32_0 = arith.constant 0 : i32
    %c0_i32_1 = arith.constant 0 : i32
    return %c0_i32, %c0_i32_0 : i32, i32
  }
}

module attributes {stable_mosaic.version = 11 : i64} {
  func.func @head_kernel(%arg0: i32, %arg1: memref<16x32xbf16, #tpu.memory_space<vmem>>, %arg2: memref<32x6xbf16, #tpu.memory_space<vmem>>, %arg3: memref<1x6xf32, #tpu.memory_space<vmem>>, %arg4: memref<6x16xbf16, #tpu.memory_space<vmem>>, %arg5: memref<1x16xf32, #tpu.memory_space<vmem>>, %arg6: memref<16x16xf32, #tpu.memory_space<vmem>>) attributes {dimension_semantics = [#tpu.dimension_semantics<parallel>], iteration_bounds = array<i64: 1>, scalar_prefetch = 0 : i64, scratch_operands = 0 : i64, tpu.core_type = #tpu.core_type<tc>, window_params = [{transform_indices = @transform_0, window_bounds = array<i64: 16, 32>}, {pipeline_mode = #tpu.pipeline_mode<synchronous>, transform_indices = @transform_1, window_bounds = array<i64: 32, 6>}, {pipeline_mode = #tpu.pipeline_mode<synchronous>, transform_indices = @transform_2, window_bounds = array<i64: 1, 6>}, {pipeline_mode = #tpu.pipeline_mode<synchronous>, transform_indices = @transform_3, window_bounds = array<i64: 6, 16>}, {pipeline_mode = #tpu.pipeline_mode<synchronous>, transform_indices = @transform_4, window_bounds = array<i64: 1, 16>}, {transform_indices = @transform_5, window_bounds = array<i64: 16, 16>}]} {
    %c0 = arith.constant 0 : index
    %c0_0 = arith.constant 0 : index
    %0 = vector.load %arg1[%c0, %c0_0] : memref<16x32xbf16, #tpu.memory_space<vmem>>, vector<16x32xbf16>
    %c0_1 = arith.constant 0 : index
    %c0_2 = arith.constant 0 : index
    %1 = vector.load %arg2[%c0_1, %c0_2] : memref<32x6xbf16, #tpu.memory_space<vmem>>, vector<32x6xbf16>
    %cst = arith.constant dense<0.000000e+00> : vector<16x6xf32>
    %2 = tpu.matmul %0, %1, %cst {dimension_numbers = #tpu.dot_dimension_numbers<[1], [0], [0], [1], [0, 0, 1, 1], [], []>} : vector<16x32xbf16>, vector<32x6xbf16>, vector<16x6xf32> -> vector<16x6xf32>
    %c0_3 = arith.constant 0 : index
    %c0_4 = arith.constant 0 : index
    %3 = vector.load %arg3[%c0_3, %c0_4] : memref<1x6xf32, #tpu.memory_space<vmem>>, vector<1x6xf32>
    %4 = vector.shape_cast %3 : vector<1x6xf32> to vector<6xf32>
    %5 = vector.shape_cast %4 : vector<6xf32> to vector<1x6xf32>
    %6 = vector.broadcast %5 : vector<1x6xf32> to vector<16x6xf32>
    %7 = arith.addf %2, %6 : vector<16x6xf32>
    %8 = arith.truncf %7 : vector<16x6xf32> to vector<16x6xbf16>
    %c0_5 = arith.constant 0 : index
    %c0_6 = arith.constant 0 : index
    %9 = vector.load %arg4[%c0_5, %c0_6] : memref<6x16xbf16, #tpu.memory_space<vmem>>, vector<6x16xbf16>
    %cst_7 = arith.constant dense<0.000000e+00> : vector<16x16xf32>
    %10 = tpu.matmul %8, %9, %cst_7 {dimension_numbers = #tpu.dot_dimension_numbers<[1], [0], [0], [1], [0, 0, 1, 1], [], []>} : vector<16x6xbf16>, vector<6x16xbf16>, vector<16x16xf32> -> vector<16x16xf32>
    %c0_8 = arith.constant 0 : index
    %c0_9 = arith.constant 0 : index
    %11 = vector.load %arg5[%c0_8, %c0_9] : memref<1x16xf32, #tpu.memory_space<vmem>>, vector<1x16xf32>
    %12 = vector.shape_cast %11 : vector<1x16xf32> to vector<16xf32>
    %13 = vector.shape_cast %12 : vector<16xf32> to vector<1x16xf32>
    %14 = vector.broadcast %13 : vector<1x16xf32> to vector<16x16xf32>
    %15 = arith.addf %10, %14 : vector<16x16xf32>
    %cst_10 = arith.constant dense<0xFF800000> : vector<16xf32>
    %16 = vector.multi_reduction <maximumf>, %15, %cst_10 [1] : vector<16x16xf32> to vector<16xf32>
    %17 = vector.shape_cast %16 : vector<16xf32> to vector<16x1xf32>
    %18 = vector.broadcast %17 : vector<16x1xf32> to vector<16x16xf32>
    %19 = arith.subf %15, %18 : vector<16x16xf32>
    %20 = math.exp %19 : vector<16x16xf32>
    %cst_11 = arith.constant dense<0.000000e+00> : vector<16xf32>
    %21 = vector.multi_reduction <add>, %20, %cst_11 [1] : vector<16x16xf32> to vector<16xf32>
    %22 = vector.shape_cast %21 : vector<16xf32> to vector<16x1xf32>
    %23 = math.log %22 : vector<16x1xf32>
    %24 = vector.broadcast %23 : vector<16x1xf32> to vector<16x16xf32>
    %25 = arith.subf %19, %24 : vector<16x16xf32>
    %c0_12 = arith.constant 0 : index
    %c0_13 = arith.constant 0 : index
    %26 = vector.load %arg6[%c0_12, %c0_13] : memref<16x16xf32, #tpu.memory_space<vmem>>, vector<16x16xf32>
    tpu.vector_store %arg6[%c0_12, %c0_13], %25 {strides = array<i32>} : memref<16x16xf32, #tpu.memory_space<vmem>>, vector<16x16xf32>,
    return
  }
  func.func @transform_0(%arg0: i32) -> (i32, i32) {
    %c0_i32 = arith.constant 0 : i32
    %c0_i32_0 = arith.constant 0 : i32
    return %arg0, %c0_i32 : i32, i32
  }
  func.func @transform_1(%arg0: i32) -> (i32, i32) {
    %c0_i32 = arith.constant 0 : i32
    %c0_i32_0 = arith.constant 0 : i32
    %c0_i32_1 = arith.constant 0 : i32
    return %c0_i32, %c0_i32_0 : i32, i32
  }
  func.func @transform_2(%arg0: i32) -> (i32, i32) {
    %c0_i32 = arith.constant 0 : i32
    %c0_i32_0 = arith.constant 0 : i32
    %c0_i32_1 = arith.constant 0 : i32
    return %c0_i32, %c0_i32_0 : i32, i32
  }
  func.func @transform_3(%arg0: i32) -> (i32, i32) {
    %c0_i32 = arith.constant 0 : i32
    %c0_i32_0 = arith.constant 0 : i32
    %c0_i32_1 = arith.constant 0 : i32
    return %c0_i32, %c0_i32_0 : i32, i32
  }
  func.func @transform_4(%arg0: i32) -> (i32, i32) {
    %c0_i32 = arith.constant 0 : i32
    %c0_i32_0 = arith.constant 0 : i32
    %c0_i32_1 = arith.constant 0 : i32
    return %c0_i32, %c0_i32_0 : i32, i32
  }
  func.func @transform_5(%arg0: i32) -> (i32, i32) {
    %c0_i32 = arith.constant 0 : i32
    %c0_i32_0 = arith.constant 0 : i32
    return %arg0, %c0_i32 : i32, i32
  }
}

</mosaic_0001>

<llo_original>
// kernel: qrnn_model_forward.6
$region0: #{qrnn_model_forward.6}
  #allocation0 [shape = 'u32[]', space=smem, size = 0x4, offset = 0x4, fixed_abs, tag = 'smem constant byte address 0x4 - core index']
  #allocation1 [shape = 'u32[144,128]{1,0:T(1,128)}', space=vmem, size = 0x12000, scoped, tag = 'internal scratch']
  #allocation2 [shape = 'f32[2,32]{1,0:T(2,128)}', space=vmem, size = 0x400, scoped, tag = 'scratch operand']
  %s0 = inlined_call_operand.vmem [shape: f32[2,32], index: 0, kind: input, shape index: {}]
  %s1 = inlined_call_operand.vmem [shape: f32[2,8,32], index: 1, kind: input, shape index: {}]
  %s2 = inlined_call_operand.vmem [shape: f32[2,8,32], index: 2, kind: input, shape index: {}]
  %s3 = inlined_call_operand.vmem [shape: f32[2,8,32], index: 3, kind: input, shape index: {}]
  %s4 = inlined_call_operand.vmem [shape: f32[2,8,32], index: 4, kind: output, shape index: {0}]
  %s5 = inlined_call_operand.vmem [shape: f32[2,32], index: 5, kind: output, shape index: {1}]
  %6 = xla_tuple %s4, %s5
  %s7 = sld [smem:[#allocation0]]
  $region38: #{qrnn_model_forward.6} parent=0
    _
  %s9 = ssub.s32 1, %s7
  %s10 = scalar_select 0, %s9, %s7
  // Predicated region
  $region2: #{qrnn_model_forward.6} parent=0 // pred_check
    _
  $region3: #{qrnn_model_forward.6} parent=0 // pred_check_branch
    %12 = sbr.rel (0) target = $region5
  $region4: #{qrnn_model_forward.6} parent=0 // pred_region
    _
  $region5: #{qrnn_model_forward.6} parent=0 // pred_fallthru
    _
  // Predicated region
  $region6: #{qrnn_model_forward.6} parent=0 // pred_check
    _
  $region7: #{qrnn_model_forward.6} parent=0 // pred_check_branch
    %14 = sbr.rel (0) target = $region9
  $region8: #{qrnn_model_forward.6} parent=0 // pred_region
    _
  $region9: #{qrnn_model_forward.6} parent=0 // pred_fallthru
    _
  // Predicated region
  $region10: #{qrnn_model_forward.6} parent=0 // pred_check
    _
  $region11: #{qrnn_model_forward.6} parent=0 // pred_check_branch
    %16 = sbr.rel (0) target = $region13
  $region12: #{qrnn_model_forward.6} parent=0 // pred_region
    _
  $region13: #{qrnn_model_forward.6} parent=0 // pred_fallthru
    _
  // Predicated region
  $region14: #{qrnn_model_forward.6} parent=0 // pred_check
    _
  $region15: #{qrnn_model_forward.6} parent=0 // pred_check_branch
    %18 = sbr.rel (0) target = $region17
  $region16: #{qrnn_model_forward.6} parent=0 // pred_region
    _
  $region17: #{qrnn_model_forward.6} parent=0 // pred_fallthru
    _
  %p19 = scmp.eq.s32.totalorder 0, 0
  // Predicated region
  $region18: #{qrnn_model_forward.6} parent=0 // pred_check
    %p20 = pneg %p19
  $region19: #{qrnn_model_forward.6} parent=0 // pred_check_branch
    %22 = sbr.rel (%p20) target = $region21
  $region20: #{qrnn_model_forward.6} parent=0 // pred_region
    %v23 = vld [vmem:[%s0] sm:$0x3]
    %vm24 = vcmask 254976
    %25 = vst.msk [vmem:[#allocation2] sm:$0x3] %vm24, %v23
  $region21: #{qrnn_model_forward.6} parent=0 // pred_fallthru
    _
  %v26 = vld [vmem:[#allocation2] sm:$0x3]
  %v27 = vld [vmem:[%s1] sm:$0x1]
  %v28 = vld [vmem:[%s1 + $0x8] sm:$0x1]
  %v29 = vld [vmem:[%s2] sm:$0x1]
  %v30 = vld [vmem:[%s2 + $0x8] sm:$0x1]
  %v32 = vrot.slane %v26, 1
  %v35 = vmul.f32 %v29, %v26
  %v36 = vmul.f32 %v30, %v32
  %v37 = vadd.f32 %v27, %v35
  %v38 = vadd.f32 %v28, %v36
  %v39 = vld [vmem:[%s3] sm:$0x1]
  %v40 = vld [vmem:[%s3 + $0x8] sm:$0x1]
  %v41 = vmul.f32 %v39, %v37
  %v42 = vmul.f32 %v40, %v38
  %vm43 = vcmask 253952
  %44 = vst.msk [vmem:[%s4] sm:$0x1] %vm43, %v41
  %45 = vst.msk [vmem:[%s4 + $0x8] sm:$0x1] %vm43, %v42
  %v46 = vld [vmem:[%s1 + $0x1] sm:$0x1]
  %v47 = vld [vmem:[%s1 + $0x9] sm:$0x1]
  %v48 = vld [vmem:[%s2 + $0x1] sm:$0x1]
  %v49 = vld [vmem:[%s2 + $0x9] sm:$0x1]
  %v50 = vmul.f32 %v48, %v37
  %v51 = vmul.f32 %v49, %v38
  %v52 = vadd.f32 %v46, %v50
  %v53 = vadd.f32 %v47, %v51
  %v54 = vld [vmem:[%s3 + $0x1] sm:$0x1]
  %v55 = vld [vmem:[%s3 + $0x9] sm:$0x1]
  %v56 = vmul.f32 %v54, %v52
  %v57 = vmul.f32 %v55, %v53
  %58 = vst.msk [vmem:[%s4 + $0x1] sm:$0x1] %vm43, %v56
  %59 = vst.msk [vmem:[%s4 + $0x9] sm:$0x1] %vm43, %v57
  %v60 = vld [vmem:[%s1 + $0x2] sm:$0x1]
  %v61 = vld [vmem:[%s1 + $0xa] sm:$0x1]
  %v62 = vld [vmem:[%s2 + $0x2] sm:$0x1]
  %v63 = vld [vmem:[%s2 + $0xa] sm:$0x1]
  %v64 = vmul.f32 %v62, %v52
  %v65 = vmul.f32 %v63, %v53
  %v66 = vadd.f32 %v60, %v64
  %v67 = vadd.f32 %v61, %v65
  %v68 = vld [vmem:[%s3 + $0x2] sm:$0x1]
  %v69 = vld [vmem:[%s3 + $0xa] sm:$0x1]
  %v70 = vmul.f32 %v68, %v66
  %v71 = vmul.f32 %v69, %v67
  %72 = vst.msk [vmem:[%s4 + $0x2] sm:$0x1] %vm43, %v70
  %73 = vst.msk [vmem:[%s4 + $0xa] sm:$0x1] %vm43, %v71
  %v74 = vld [vmem:[%s1 + $0x3] sm:$0x1]
  %v75 = vld [vmem:[%s1 + $0xb] sm:$0x1]
  %v76 = vld [vmem:[%s2 + $0x3] sm:$0x1]
  %v77 = vld [vmem:[%s2 + $0xb] sm:$0x1]
  %v78 = vmul.f32 %v76, %v66
  %v79 = vmul.f32 %v77, %v67
  %v80 = vadd.f32 %v74, %v78
  %v81 = vadd.f32 %v75, %v79
  %v82 = vld [vmem:[%s3 + $0x3] sm:$0x1]
  %v83 = vld [vmem:[%s3 + $0xb] sm:$0x1]
  %v84 = vmul.f32 %v82, %v80
  %v85 = vmul.f32 %v83, %v81
  %86 = vst.msk [vmem:[%s4 + $0x3] sm:$0x1] %vm43, %v84
  %87 = vst.msk [vmem:[%s4 + $0xb] sm:$0x1] %vm43, %v85
  %v88 = vld [vmem:[%s1 + $0x4] sm:$0x1]
  %v89 = vld [vmem:[%s1 + $0xc] sm:$0x1]
  %v90 = vld [vmem:[%s2 + $0x4] sm:$0x1]
  %v91 = vld [vmem:[%s2 + $0xc] sm:$0x1]
  %v92 = vmul.f32 %v90, %v80
  %v93 = vmul.f32 %v91, %v81
  %v94 = vadd.f32 %v88, %v92
  %v95 = vadd.f32 %v89, %v93
  %v96 = vld [vmem:[%s3 + $0x4] sm:$0x1]
  %v97 = vld [vmem:[%s3 + $0xc] sm:$0x1]
  %v98 = vmul.f32 %v96, %v94
  %v99 = vmul.f32 %v97, %v95
  %100 = vst.msk [vmem:[%s4 + $0x4] sm:$0x1] %vm43, %v98
  %101 = vst.msk [vmem:[%s4 + $0xc] sm:$0x1] %vm43, %v99
  %v102 = vld [vmem:[%s1 + $0x5] sm:$0x1]
  %v103 = vld [vmem:[%s1 + $0xd] sm:$0x1]
  %v104 = vld [vmem:[%s2 + $0x5] sm:$0x1]
  %v105 = vld [vmem:[%s2 + $0xd] sm:$0x1]
  %v106 = vmul.f32 %v104, %v94
  %v107 = vmul.f32 %v105, %v95
  %v108 = vadd.f32 %v102, %v106
  %v109 = vadd.f32 %v103, %v107
  %v110 = vld [vmem:[%s3 + $0x5] sm:$0x1]
  %v111 = vld [vmem:[%s3 + $0xd] sm:$0x1]
  %v112 = vmul.f32 %v110, %v108
  %v113 = vmul.f32 %v111, %v109
  %114 = vst.msk [vmem:[%s4 + $0x5] sm:$0x1] %vm43, %v112
  %115 = vst.msk [vmem:[%s4 + $0xd] sm:$0x1] %vm43, %v113
  %v116 = vld [vmem:[%s1 + $0x6] sm:$0x1]
  %v117 = vld [vmem:[%s1 + $0xe] sm:$0x1]
  %v118 = vld [vmem:[%s2 + $0x6] sm:$0x1]
  %v119 = vld [vmem:[%s2 + $0xe] sm:$0x1]
  %v120 = vmul.f32 %v118, %v108
  %v121 = vmul.f32 %v119, %v109
  %v122 = vadd.f32 %v116, %v120
  %v123 = vadd.f32 %v117, %v121
  %v124 = vld [vmem:[%s3 + $0x6] sm:$0x1]
  %v125 = vld [vmem:[%s3 + $0xe] sm:$0x1]
  %v126 = vmul.f32 %v124, %v122
  %v127 = vmul.f32 %v125, %v123
  %128 = vst.msk [vmem:[%s4 + $0x6] sm:$0x1] %vm43, %v126
  %129 = vst.msk [vmem:[%s4 + $0xe] sm:$0x1] %vm43, %v127
  %v130 = vld [vmem:[%s1 + $0x7] sm:$0x1]
  %v131 = vld [vmem:[%s1 + $0xf] sm:$0x1]
  %v132 = vld [vmem:[%s2 + $0x7] sm:$0x1]
  %v133 = vld [vmem:[%s2 + $0xf] sm:$0x1]
  %v134 = vmul.f32 %v132, %v122
  %v135 = vmul.f32 %v133, %v123
  %v136 = vadd.f32 %v130, %v134
  %v137 = vadd.f32 %v131, %v135
  %v138 = vld [vmem:[%s3 + $0x7] sm:$0x1]
  %v139 = vld [vmem:[%s3 + $0xf] sm:$0x1]
  %v140 = vmul.f32 %v138, %v136
  %v141 = vmul.f32 %v139, %v137
  %142 = vst.msk [vmem:[%s4 + $0x7] sm:$0x1] %vm43, %v140
  %143 = vst.msk [vmem:[%s4 + $0xf] sm:$0x1] %vm43, %v141
  %v146 = vrot.slane %v137, 7
  %vm147 = vcmask 1041409
  %v148 = vsel %vm147, %v146, %v136
  %vm150 = vcmask 254976
  %151 = vst.msk [vmem:[#allocation2] sm:$0x3] %vm150, %v148
  %152 = vst.msk [vmem:[%s5] sm:$0x3] %vm150, %v148
  // Predicated region
  $region22: #{qrnn_model_forward.6} parent=0 // pred_check
    _
  $region23: #{qrnn_model_forward.6} parent=0 // pred_check_branch
    %154 = sbr.rel (0) target = $region25
  $region24: #{qrnn_model_forward.6} parent=0 // pred_region
    _
  $region25: #{qrnn_model_forward.6} parent=0 // pred_fallthru
    _
  // Predicated region
  $region26: #{qrnn_model_forward.6} parent=0 // pred_check
    _
  $region27: #{qrnn_model_forward.6} parent=0 // pred_check_branch
    %156 = sbr.rel (0) target = $region29
  $region28: #{qrnn_model_forward.6} parent=0 // pred_region
    _
  $region29: #{qrnn_model_forward.6} parent=0 // pred_fallthru
    _
  // Predicated region
  $region30: #{qrnn_model_forward.6} parent=0 // pred_check
    _
  $region31: #{qrnn_model_forward.6} parent=0 // pred_check_branch
    %158 = sbr.rel (0) target = $region33
  $region32: #{qrnn_model_forward.6} parent=0 // pred_region
    _
  $region33: #{qrnn_model_forward.6} parent=0 // pred_fallthru
    _
  // Predicated region
  $region34: #{qrnn_model_forward.6} parent=0 // pred_check
    _
  $region35: #{qrnn_model_forward.6} parent=0 // pred_check_branch
    %160 = sbr.rel (0) target = $region37
  $region36: #{qrnn_model_forward.6} parent=0 // pred_region
    _
  $region37: #{qrnn_model_forward.6} parent=0 // pred_fallthru
    _

// kernel: qrnn_model_forward.5
$region0: #{qrnn_model_forward.5}
  #allocation0 [shape = 'u32[]', space=smem, size = 0x4, offset = 0x4, fixed_abs, tag = 'smem constant byte address 0x4 - core index']
  #allocation1 [shape = 'u32[144,128]{1,0:T(1,128)}', space=vmem, size = 0x12000, scoped, tag = 'internal scratch']
  %s0 = inlined_call_operand.vmem [shape: bf16[16,32], index: 0, kind: input, shape index: {}]
  %s1 = inlined_call_operand.vmem [shape: bf16[32,32], index: 1, kind: input, shape index: {}]
  %s2 = inlined_call_operand.vmem [shape: bf16[32,32], index: 2, kind: input, shape index: {}]
  %s3 = inlined_call_operand.vmem [shape: bf16[32,32], index: 3, kind: input, shape index: {}]
  %s4 = inlined_call_operand.vmem [shape: f32[1,32], index: 4, kind: input, shape index: {}]
  %s5 = inlined_call_operand.vmem [shape: f32[1,32], index: 5, kind: input, shape index: {}]
  %s6 = inlined_call_operand.vmem [shape: f32[1,32], index: 6, kind: input, shape index: {}]
  %s7 = inlined_call_operand.vmem [shape: f32[16,32], index: 7, kind: output, shape index: {0}]
  %s8 = inlined_call_operand.vmem [shape: f32[16,32], index: 8, kind: output, shape index: {1}]
  %s9 = inlined_call_operand.vmem [shape: f32[16,32], index: 9, kind: output, shape index: {2}]
  %10 = xla_tuple %s7, %s8, %s9
  %s11 = sld [smem:[#allocation0]]
  $region54: #{qrnn_model_forward.5} parent=0
    _
  %s13 = ssub.s32 1, %s11
  %s14 = scalar_select 0, %s13, %s11
  // Predicated region
  $region2: #{qrnn_model_forward.5} parent=0 // pred_check
    _
  $region3: #{qrnn_model_forward.5} parent=0 // pred_check_branch
    %16 = sbr.rel (0) target = $region5
  $region4: #{qrnn_model_forward.5} parent=0 // pred_region
    _
  $region5: #{qrnn_model_forward.5} parent=0 // pred_fallthru
    _
  // Predicated region
  $region6: #{qrnn_model_forward.5} parent=0 // pred_check
    _
  $region7: #{qrnn_model_forward.5} parent=0 // pred_check_branch
    %18 = sbr.rel (0) target = $region9
  $region8: #{qrnn_model_forward.5} parent=0 // pred_region
    _
  $region9: #{qrnn_model_forward.5} parent=0 // pred_fallthru
    _
  // Predicated region
  $region10: #{qrnn_model_forward.5} parent=0 // pred_check
    _
  $region11: #{qrnn_model_forward.5} parent=0 // pred_check_branch
    %20 = sbr.rel (0) target = $region13
  $region12: #{qrnn_model_forward.5} parent=0 // pred_region
    _
  $region13: #{qrnn_model_forward.5} parent=0 // pred_fallthru
    _
  // Predicated region
  $region14: #{qrnn_model_forward.5} parent=0 // pred_check
    _
  $region15: #{qrnn_model_forward.5} parent=0 // pred_check_branch
    %22 = sbr.rel (0) target = $region17
  $region16: #{qrnn_model_forward.5} parent=0 // pred_region
    _
  $region17: #{qrnn_model_forward.5} parent=0 // pred_fallthru
    _
  // Predicated region
  $region18: #{qrnn_model_forward.5} parent=0 // pred_check
    _
  $region19: #{qrnn_model_forward.5} parent=0 // pred_check_branch
    %24 = sbr.rel (0) target = $region21
  $region20: #{qrnn_model_forward.5} parent=0 // pred_region
    _
  $region21: #{qrnn_model_forward.5} parent=0 // pred_fallthru
    _
  // Predicated region
  $region22: #{qrnn_model_forward.5} parent=0 // pred_check
    _
  $region23: #{qrnn_model_forward.5} parent=0 // pred_check_branch
    %26 = sbr.rel (0) target = $region25
  $region24: #{qrnn_model_forward.5} parent=0 // pred_region
    _
  $region25: #{qrnn_model_forward.5} parent=0 // pred_fallthru
    _
  // Predicated region
  $region26: #{qrnn_model_forward.5} parent=0 // pred_check
    _
  $region27: #{qrnn_model_forward.5} parent=0 // pred_check_branch
    %28 = sbr.rel (0) target = $region29
  $region28: #{qrnn_model_forward.5} parent=0 // pred_region
    _
  $region29: #{qrnn_model_forward.5} parent=0 // pred_fallthru
    _
  %v30 = vld [vmem:[%s0] sm:$0xf]
  %v31 = vld [vmem:[%s0 + $0x4] sm:$0xf]
  %v32 = vld [vmem:[%s1] sm:$0xf]
  %v33 = vld [vmem:[%s1 + $0x4] sm:$0xf]
  %v34 = vld [vmem:[%s1 + $0x8] sm:$0xf]
  %v35 = vld [vmem:[%s1 + $0xc] sm:$0xf]
  %v36 = vld [vmem:[%s4] sm:$0x1]
  %v38 = vlaneseq
  %v39 = vshrl.u32 %v38, 7
  %v40 = vsub.s32 0, %v39
  %v41 = vrot.slane %v36, %v40
  %v45 = vunpack.c.l.b16 %v30
  %v46 = vunpack.c.l.b16 %v31
  %v47 = vpack.c.b16 %v46, %v45
  %v52 = vunpack.c.l.b16 %v32
  %v53 = vunpack.c.l.b16 %v33
  %v54 = vunpack.c.l.b16 %v34
  %v55 = vunpack.c.l.b16 %v35
  %v56 = vpack.c.b16 %v53, %v52
  %v57 = vpack.c.b16 %v55, %v54
  %vm60 = vcmask 261120
  %v62 = vsel %vm60, %v47, 0
  %64 = vmatprep.subr.bf16.mxu0 0
  %65 = vmatpush1.bf16.msra.mxu0 %v56
  %66 = vmatprep.subr.bf16.mxu0 0
  %67 = vmatpush1.bf16.msra.mxu0 %v57
  %68 = vmatprep.subr.bf16.mxu0 0
  %69 = vmatpush1.bf16.msra.mxu0 0
  %70 = vmatprep.subr.bf16.mxu0 0
  %71 = vmatpush1.bf16.msra.mxu0 0
  %72 = vmatprep.subr.bf16.mxu0 0
  %73 = vmatpush1.bf16.msra.mxu0 0
  %74 = vmatprep.subr.bf16.mxu0 0
  %75 = vmatpush1.bf16.msra.mxu0 0
  %76 = vmatprep.subr.bf16.mxu0 0
  %77 = vmatpush1.bf16.msra.mxu0 0
  %78 = vmatprep.subr.bf16.mxu0 0
  %79 = vmatpush1.bf16.msra.mxu0 0
  %80 = vmatprep.subr.bf16.mxu0 0
  %81 = vmatpush1.bf16.msra.mxu0 0
  %82 = vmatprep.subr.bf16.mxu0 0
  %83 = vmatpush1.bf16.msra.mxu0 0
  %84 = vmatprep.subr.bf16.mxu0 0
  %85 = vmatpush1.bf16.msra.mxu0 0
  %86 = vmatprep.subr.bf16.mxu0 0
  %87 = vmatpush1.bf16.msra.mxu0 0
  %88 = vmatprep.subr.bf16.mxu0 0
  %89 = vmatpush1.bf16.msra.mxu0 0
  %90 = vmatprep.subr.bf16.mxu0 0
  %91 = vmatpush1.bf16.msra.mxu0 0
  %92 = vmatprep.subr.bf16.mxu0 0
  %93 = vmatpush1.bf16.msra.mxu0 0
  %94 = vmatprep.subr.bf16.mxu0 0
  %95 = vmatpush1.bf16.msra.mxu0 0
  %96 = vmatprep.mubr.bf16.mxu0 0
  %97 = vmatmul.mubr.bf16.gmra.mrb[0].mxu0 %v62
  %v98 = vpop.f32.mrb[0].mxu0
  %v99 = vadd.f32 %v41, %v98
  %v100 = vpop.f32.mrb[0].mxu0
  %v101 = vpop.f32.mrb[0].mxu0
  %v102 = vadd.f32 %v41, %v101
  %v103 = vpop.f32.mrb[0].mxu0
  %104 = vdwg.mxu0
  %v105 = vtanh.pop %v99
  %v106 = vtanh.pop %v102
  %v107 = vld [vmem:[%s2] sm:$0xf]
  %v108 = vld [vmem:[%s2 + $0x4] sm:$0xf]
  %v109 = vld [vmem:[%s2 + $0x8] sm:$0xf]
  %v110 = vld [vmem:[%s2 + $0xc] sm:$0xf]
  %v111 = vld [vmem:[%s5] sm:$0x1]
  %v113 = vlaneseq
  %v114 = vshrl.u32 %v113, 7
  %v115 = vsub.s32 0, %v114
  %v116 = vrot.slane %v111, %v115
  %v122 = vunpack.c.l.b16 %v107
  %v123 = vunpack.c.l.b16 %v108
  %v124 = vunpack.c.l.b16 %v109
  %v125 = vunpack.c.l.b16 %v110
  %v126 = vpack.c.b16 %v123, %v122
  %v127 = vpack.c.b16 %v125, %v124
  %130 = vmatprep.subr.bf16.mxu0 0
  %131 = vmatpush1.bf16.msra.mxu0 %v126
  %132 = vmatprep.subr.bf16.mxu0 0
  %133 = vmatpush1.bf16.msra.mxu0 %v127
  %134 = vmatprep.subr.bf16.mxu0 0
  %135 = vmatpush1.bf16.msra.mxu0 0
  %136 = vmatprep.subr.bf16.mxu0 0
  %137 = vmatpush1.bf16.msra.mxu0 0
  %138 = vmatprep.subr.bf16.mxu0 0
  %139 = vmatpush1.bf16.msra.mxu0 0
  %140 = vmatprep.subr.bf16.mxu0 0
  %141 = vmatpush1.bf16.msra.mxu0 0
  %142 = vmatprep.subr.bf16.mxu0 0
  %143 = vmatpush1.bf16.msra.mxu0 0
  %144 = vmatprep.subr.bf16.mxu0 0
  %145 = vmatpush1.bf16.msra.mxu0 0
  %146 = vmatprep.subr.bf16.mxu0 0
  %147 = vmatpush1.bf16.msra.mxu0 0
  %148 = vmatprep.subr.bf16.mxu0 0
  %149 = vmatpush1.bf16.msra.mxu0 0
  %150 = vmatprep.subr.bf16.mxu0 0
  %151 = vmatpush1.bf16.msra.mxu0 0
  %152 = vmatprep.subr.bf16.mxu0 0
  %153 = vmatpush1.bf16.msra.mxu0 0
  %154 = vmatprep.subr.bf16.mxu0 0
  %155 = vmatpush1.bf16.msra.mxu0 0
  %156 = vmatprep.subr.bf16.mxu0 0
  %157 = vmatpush1.bf16.msra.mxu0 0
  %158 = vmatprep.subr.bf16.mxu0 0
  %159 = vmatpush1.bf16.msra.mxu0 0
  %160 = vmatprep.subr.bf16.mxu0 0
  %161 = vmatpush1.bf16.msra.mxu0 0
  %162 = vmatprep.mubr.bf16.mxu0 0
  %163 = vmatmul.mubr.bf16.gmra.mrb[0].mxu0 %v62
  %v164 = vpop.f32.mrb[0].mxu0
  %v165 = vadd.f32 %v116, %v164
  %v166 = vpop.f32.mrb[0].mxu0
  %v167 = vpop.f32.mrb[0].mxu0
  %v168 = vadd.f32 %v116, %v167
  %v169 = vpop.f32.mrb[0].mxu0
  %170 = vdwg.mxu0
  %v171 = vxor.u32 %v165, 2147483648
  %v172 = vxor.u32 %v168, 2147483648
  %v173 = vmul.f32 %v171, 1.442695
  %v174 = vpow.pop %v173
  %v175 = vmul.f32 %v172, 1.442695
  %v176 = vpow.pop %v175
  %v177 = vadd.f32 %v174, 1.0
  %v178 = vadd.f32 %v176, 1.0
  %v179 = vrcp.pop %v177
  %v180 = vmul.f32 1.0, %v179
  %v181 = vrcp.pop %v178
  %v182 = vmul.f32 1.0, %v181
  %v183 = vld [vmem:[%s3] sm:$0xf]
  %v184 = vld [vmem:[%s3 + $0x4] sm:$0xf]
  %v185 = vld [vmem:[%s3 + $0x8] sm:$0xf]
  %v186 = vld [vmem:[%s3 + $0xc] sm:$0xf]
  %v187 = vld [vmem:[%s6] sm:$0x1]
  %v189 = vlaneseq
  %v190 = vshrl.u32 %v189, 7
  %v191 = vsub.s32 0, %v190
  %v192 = vrot.slane %v187, %v191
  %v198 = vunpack.c.l.b16 %v183
  %v199 = vunpack.c.l.b16 %v184
  %v200 = vunpack.c.l.b16 %v185
  %v201 = vunpack.c.l.b16 %v186
  %v202 = vpack.c.b16 %v199, %v198
  %v203 = vpack.c.b16 %v201, %v200
  %206 = vmatprep.subr.bf16.mxu0 0
  %207 = vmatpush1.bf16.msra.mxu0 %v202
  %208 = vmatprep.subr.bf16.mxu0 0
  %209 = vmatpush1.bf16.msra.mxu0 %v203
  %210 = vmatprep.subr.bf16.mxu0 0
  %211 = vmatpush1.bf16.msra.mxu0 0
  %212 = vmatprep.subr.bf16.mxu0 0
  %213 = vmatpush1.bf16.msra.mxu0 0
  %214 = vmatprep.subr.bf16.mxu0 0
  %215 = vmatpush1.bf16.msra.mxu0 0
  %216 = vmatprep.subr.bf16.mxu0 0
  %217 = vmatpush1.bf16.msra.mxu0 0
  %218 = vmatprep.subr.bf16.mxu0 0
  %219 = vmatpush1.bf16.msra.mxu0 0
  %220 = vmatprep.subr.bf16.mxu0 0
  %221 = vmatpush1.bf16.msra.mxu0 0
  %222 = vmatprep.subr.bf16.mxu0 0
  %223 = vmatpush1.bf16.msra.mxu0 0
  %224 = vmatprep.subr.bf16.mxu0 0
  %225 = vmatpush1.bf16.msra.mxu0 0
  %226 = vmatprep.subr.bf16.mxu0 0
  %227 = vmatpush1.bf16.msra.mxu0 0
  %228 = vmatprep.subr.bf16.mxu0 0
  %229 = vmatpush1.bf16.msra.mxu0 0
  %230 = vmatprep.subr.bf16.mxu0 0
  %231 = vmatpush1.bf16.msra.mxu0 0
  %232 = vmatprep.subr.bf16.mxu0 0
  %233 = vmatpush1.bf16.msra.mxu0 0
  %234 = vmatprep.subr.bf16.mxu0 0
  %235 = vmatpush1.bf16.msra.mxu0 0
  %236 = vmatprep.subr.bf16.mxu0 0
  %237 = vmatpush1.bf16.msra.mxu0 0
  %238 = vmatprep.mubr.bf16.mxu0 0
  %239 = vmatmul.mubr.bf16.gmra.mrb[0].mxu0 %v62
  %v240 = vpop.f32.mrb[0].mxu0
  %v241 = vadd.f32 %v192, %v240
  %v242 = vpop.f32.mrb[0].mxu0
  %v243 = vpop.f32.mrb[0].mxu0
  %v244 = vadd.f32 %v192, %v243
  %v245 = vpop.f32.mrb[0].mxu0
  %246 = vdwg.mxu0
  %v247 = vxor.u32 %v241, 2147483648
  %v248 = vxor.u32 %v244, 2147483648
  %v249 = vmul.f32 %v247, 1.442695
  %v250 = vpow.pop %v249
  %v251 = vmul.f32 %v248, 1.442695
  %v252 = vpow.pop %v251
  %v253 = vadd.f32 %v250, 1.0
  %v254 = vadd.f32 %v252, 1.0
  %v255 = vrcp.pop %v253
  %v256 = vmul.f32 1.0, %v255
  %v257 = vrcp.pop %v254
  %v258 = vmul.f32 1.0, %v257
  %v259 = vmul.f32 %v180, %v105
  %v260 = vmul.f32 %v182, %v106
  %261 = vst.msk [vmem:[%s7] sm:$0xff] %vm60, %v259
  %262 = vst.msk [vmem:[%s7 + $0x8] sm:$0xff] %vm60, %v260
  %v263 = vsub.f32 1.0, %v180
  %v264 = vsub.f32 1.0, %v182
  %265 = vst.msk [vmem:[%s8] sm:$0xff] %vm60, %v263
  %266 = vst.msk [vmem:[%s8 + $0x8] sm:$0xff] %vm60, %v264
  %267 = vst.msk [vmem:[%s9] sm:$0xff] %vm60, %v256
  %268 = vst.msk [vmem:[%s9 + $0x8] sm:$0xff] %vm60, %v258
  // Predicated region
  $region30: #{qrnn_model_forward.5} parent=0 // pred_check
    _
  $region31: #{qrnn_model_forward.5} parent=0 // pred_check_branch
    %270 = sbr.rel (0) target = $region33
  $region32: #{qrnn_model_forward.5} parent=0 // pred_region
    _
  $region33: #{qrnn_model_forward.5} parent=0 // pred_fallthru
    _
  // Predicated region
  $region34: #{qrnn_model_forward.5} parent=0 // pred_check
    _
  $region35: #{qrnn_model_forward.5} parent=0 // pred_check_branch
    %272 = sbr.rel (0) target = $region37
  $region36: #{qrnn_model_forward.5} parent=0 // pred_region
    _
  $region37: #{qrnn_model_forward.5} parent=0 // pred_fallthru
    _
  // Predicated region
  $region38: #{qrnn_model_forward.5} parent=0 // pred_check
    _
  $region39: #{qrnn_model_forward.5} parent=0 // pred_check_branch
    %274 = sbr.rel (0) target = $region41
  $region40: #{qrnn_model_forward.5} parent=0 // pred_region
    _
  $region41: #{qrnn_model_forward.5} parent=0 // pred_fallthru
    _
  // Predicated region
  $region42: #{qrnn_model_forward.5} parent=0 // pred_check
    _
  $region43: #{qrnn_model_forward.5} parent=0 // pred_check_branch
    %276 = sbr.rel (0) target = $region45
  $region44: #{qrnn_model_forward.5} parent=0 // pred_region
    _
  $region45: #{qrnn_model_forward.5} parent=0 // pred_fallthru
    _
  // Predicated region
  $region46: #{qrnn_model_forward.5} parent=0 // pred_check
    _
  $region47: #{qrnn_model_forward.5} parent=0 // pred_check_branch
    %278 = sbr.rel (0) target = $region49
  $region48: #{qrnn_model_forward.5} parent=0 // pred_region
    _
  $region49: #{qrnn_model_forward.5} parent=0 // pred_fallthru
    _
  // Predicated region
  $region50: #{qrnn_model_forward.5} parent=0 // pred_check
    _
  $region51: #{qrnn_model_forward.5} parent=0 // pred_check_branch
    %280 = sbr.rel (0) target = $region53
  $region52: #{qrnn_model_forward.5} parent=0 // pred_region
    _
  $region53: #{qrnn_model_forward.5} parent=0 // pred_fallthru
    _

// kernel: qrnn_model_forward.9
$region0: #{qrnn_model_forward.9}
  #allocation0 [shape = 'u32[]', space=smem, size = 0x4, offset = 0x4, fixed_abs, tag = 'smem constant byte address 0x4 - core index']
  #allocation1 [shape = 'u32[144,128]{1,0:T(1,128)}', space=vmem, size = 0x12000, scoped, tag = 'internal scratch']
  %s0 = inlined_call_operand.vmem [shape: bf16[16,32], index: 0, kind: input, shape index: {}]
  %s1 = inlined_call_operand.vmem [shape: bf16[32,6], index: 1, kind: input, shape index: {}]
  %s2 = inlined_call_operand.vmem [shape: f32[1,6], index: 2, kind: input, shape index: {}]
  %s3 = inlined_call_operand.vmem [shape: bf16[6,16], index: 3, kind: input, shape index: {}]
  %s4 = inlined_call_operand.vmem [shape: f32[1,16], index: 4, kind: input, shape index: {}]
  %s5 = inlined_call_operand.hbm [shape: f32[16,16], index: 5, kind: output, shape index: {}]
  %s6 = sld [smem:[#allocation0]]
  $region30: #{qrnn_model_forward.9} parent=0
    _
  %s8 = ssub.s32 1, %s6
  %s9 = scalar_select 0, %s8, %s6
  $region1: #{qrnn_model_forward.9} parent=0
    #allocation2 [shape = 'u8[8192]{0}', space=vmem, size = 0x2000, scoped, tag = 'output window, operand 0, single buffered']
    #allocation3 [shape = 's32[1]{0}', space=sflag, size = 0x4, scoped, tag = 'scoped memory for qrnn_model_forward.9']
    %10 = vsyncpa [#allocation3], 0
    // Predicated region
    $region2: #{qrnn_model_forward.9} parent=1 // pred_check
      _
    $region3: #{qrnn_model_forward.9} parent=1 // pred_check_branch
      %12 = sbr.rel (0) target = $region5
    $region4: #{qrnn_model_forward.9} parent=1 // pred_region
      _
    $region5: #{qrnn_model_forward.9} parent=1 // pred_fallthru
      _
    // Predicated region
    $region6: #{qrnn_model_forward.9} parent=1 // pred_check
      _
    $region7: #{qrnn_model_forward.9} parent=1 // pred_check_branch
      %14 = sbr.rel (0) target = $region9
    $region8: #{qrnn_model_forward.9} parent=1 // pred_region
      _
    $region9: #{qrnn_model_forward.9} parent=1 // pred_fallthru
      _
    // Predicated region
    $region10: #{qrnn_model_forward.9} parent=1 // pred_check
      _
    $region11: #{qrnn_model_forward.9} parent=1 // pred_check_branch
      %16 = sbr.rel (0) target = $region13
    $region12: #{qrnn_model_forward.9} parent=1 // pred_region
      _
    $region13: #{qrnn_model_forward.9} parent=1 // pred_fallthru
      _
    // Predicated region
    $region14: #{qrnn_model_forward.9} parent=1 // pred_check
      _
    $region15: #{qrnn_model_forward.9} parent=1 // pred_check_branch
      %18 = sbr.rel (0) target = $region17
    $region16: #{qrnn_model_forward.9} parent=1 // pred_region
      _
    $region17: #{qrnn_model_forward.9} parent=1 // pred_fallthru
      _
    // Predicated region
    $region18: #{qrnn_model_forward.9} parent=1 // pred_check
      _
    $region19: #{qrnn_model_forward.9} parent=1 // pred_check_branch
      %20 = sbr.rel (0) target = $region21
    $region20: #{qrnn_model_forward.9} parent=1 // pred_region
      _
    $region21: #{qrnn_model_forward.9} parent=1 // pred_fallthru
      _
    %v22 = vld [vmem:[%s0] sm:$0xf]
    %v23 = vld [vmem:[%s0 + $0x4] sm:$0xf]
    %v24 = vld [vmem:[%s1] sm:$0xf]
    %v25 = vld [vmem:[%s1 + $0x4] sm:$0xf]
    %v26 = vld [vmem:[%s1 + $0x8] sm:$0xf]
    %v27 = vld [vmem:[%s1 + $0xc] sm:$0xf]
    %v28 = vld [vmem:[%s2] sm:$0x1]
    %v30 = vlaneseq
    %v31 = vshrl.u32 %v30, 7
    %v32 = vsub.s32 0, %v31
    %v33 = vrot.slane %v28, %v32
    %v37 = vunpack.c.l.b16 %v22
    %v38 = vunpack.c.l.b16 %v23
    %v39 = vpack.c.b16 %v38, %v37
    %v44 = vunpack.c.l.b16 %v24
    %v45 = vunpack.c.l.b16 %v25
    %v46 = vunpack.c.l.b16 %v26
    %v47 = vunpack.c.l.b16 %v27
    %v48 = vpack.c.b16 %v45, %v44
    %v49 = vpack.c.b16 %v47, %v46
    %vm52 = vcmask 261120
    %v54 = vsel %vm52, %v39, 0
    %56 = vmatprep.subr.bf16.mxu0 0
    %57 = vmatpush1.bf16.msra.mxu0 %v48
    %58 = vmatprep.subr.bf16.mxu0 0
    %59 = vmatpush1.bf16.msra.mxu0 %v49
    %60 = vmatprep.subr.bf16.mxu0 0
    %61 = vmatpush1.bf16.msra.mxu0 0
    %62 = vmatprep.subr.bf16.mxu0 0
    %63 = vmatpush1.bf16.msra.mxu0 0
    %64 = vmatprep.subr.bf16.mxu0 0
    %65 = vmatpush1.bf16.msra.mxu0 0
    %66 = vmatprep.subr.bf16.mxu0 0
    %67 = vmatpush1.bf16.msra.mxu0 0
    %68 = vmatprep.subr.bf16.mxu0 0
    %69 = vmatpush1.bf16.msra.mxu0 0
    %70 = vmatprep.subr.bf16.mxu0 0
    %71 = vmatpush1.bf16.msra.mxu0 0
    %72 = vmatprep.subr.bf16.mxu0 0
    %73 = vmatpush1.bf16.msra.mxu0 0
    %74 = vmatprep.subr.bf16.mxu0 0
    %75 = vmatpush1.bf16.msra.mxu0 0
    %76 = vmatprep.subr.bf16.mxu0 0
    %77 = vmatpush1.bf16.msra.mxu0 0
    %78 = vmatprep.subr.bf16.mxu0 0
    %79 = vmatpush1.bf16.msra.mxu0 0
    %80 = vmatprep.subr.bf16.mxu0 0
    %81 = vmatpush1.bf16.msra.mxu0 0
    %82 = vmatprep.subr.bf16.mxu0 0
    %83 = vmatpush1.bf16.msra.mxu0 0
    %84 = vmatprep.subr.bf16.mxu0 0
    %85 = vmatpush1.bf16.msra.mxu0 0
    %86 = vmatprep.subr.bf16.mxu0 0
    %87 = vmatpush1.bf16.msra.mxu0 0
    %88 = vmatprep.mubr.bf16.mxu0 0
    %89 = vmatmul.mubr.bf16.gmra.mrb[0].mxu0 %v54
    %v90 = vpop.f32.mrb[0].mxu0
    %v91 = vadd.f32 %v33, %v90
    %v92 = vpop.f32.mrb[0].mxu0
    %v93 = vpop.f32.mrb[0].mxu0
    %v94 = vadd.f32 %v33, %v93
    %v95 = vpop.f32.mrb[0].mxu0
    %96 = vdwg.mxu0
    %v97 = vpack.c.bf16 %v94, %v91
    %v98 = vld [vmem:[%s3] sm:$0x7]
    %v99 = vld [vmem:[%s4] sm:$0x1]
    %v101 = vlaneseq
    %v102 = vshrl.u32 %v101, 7
    %v103 = vsub.s32 0, %v102
    %v104 = vrot.slane %v99, %v103
    %vm106 = vcmask 48128
    %v108 = vsel %vm106, %v97, 0
    %vm110 = vcmask 1042432
    %v112 = vsel %vm110, %v98, 0
    %114 = vmatprep.subr.bf16.mxu0 0
    %115 = vmatpush1.bf16.msra.mxu0 %v112
    %116 = vmatprep.subr.bf16.mxu0 0
    %117 = vmatpush1.bf16.msra.mxu0 0
    %118 = vmatprep.subr.bf16.mxu0 0
    %119 = vmatpush1.bf16.msra.mxu0 0
    %120 = vmatprep.subr.bf16.mxu0 0
    %121 = vmatpush1.bf16.msra.mxu0 0
    %122 = vmatprep.subr.bf16.mxu0 0
    %123 = vmatpush1.bf16.msra.mxu0 0
    %124 = vmatprep.subr.bf16.mxu0 0
    %125 = vmatpush1.bf16.msra.mxu0 0
    %126 = vmatprep.subr.bf16.mxu0 0
    %127 = vmatpush1.bf16.msra.mxu0 0
    %128 = vmatprep.subr.bf16.mxu0 0
    %129 = vmatpush1.bf16.msra.mxu0 0
    %130 = vmatprep.subr.bf16.mxu0 0
    %131 = vmatpush1.bf16.msra.mxu0 0
    %132 = vmatprep.subr.bf16.mxu0 0
    %133 = vmatpush1.bf16.msra.mxu0 0
    %134 = vmatprep.subr.bf16.mxu0 0
    %135 = vmatpush1.bf16.msra.mxu0 0
    %136 = vmatprep.subr.bf16.mxu0 0
    %137 = vmatpush1.bf16.msra.mxu0 0
    %138 = vmatprep.subr.bf16.mxu0 0
    %139 = vmatpush1.bf16.msra.mxu0 0
    %140 = vmatprep.subr.bf16.mxu0 0
    %141 = vmatpush1.bf16.msra.mxu0 0
    %142 = vmatprep.subr.bf16.mxu0 0
    %143 = vmatpush1.bf16.msra.mxu0 0
    %144 = vmatprep.subr.bf16.mxu0 0
    %145 = vmatpush1.bf16.msra.mxu0 0
    %146 = vmatprep.mubr.bf16.mxu0 0
    %147 = vmatmul.mubr.bf16.gmra.mrb[0].mxu0 %v108
    %v148 = vpop.f32.mrb[0].mxu0
    %v149 = vadd.f32 %v104, %v148
    %v150 = vpop.f32.mrb[0].mxu0
    %v151 = vpop.f32.mrb[0].mxu0
    %v152 = vadd.f32 %v104, %v151
    %v153 = vpop.f32.mrb[0].mxu0
    %154 = vdwg.mxu0
    %vm155 = vcmask 130048
    %v156 = vsel %vm155, %v149, -inf
    %157 = vmax.xlane.f32.xlu0 %v156
    %v158 = vpop.xlane.xlu0 %157
    %v159 = vsel %vm155, %v152, -inf
    %160 = vmax.xlane.f32.xlu0 %v159
    %v161 = vpop.xlane.xlu0 %160
    %v162 = vsub.f32 %v149, %v158
    %v163 = vsub.f32 %v152, %v161
    %v164 = vmul.f32 %v162, 1.442695
    %v165 = vpow.pop %v164
    %v166 = vmul.f32 %v163, 1.442695
    %v167 = vpow.pop %v166
    %v168 = vsel %vm155, %v165, 0.0
    %169 = vadd.xlane.f32.xlu0 %v168
    %v170 = vpop.xlane.xlu0 %169
    %v171 = vsel %vm155, %v167, 0.0
    %172 = vadd.xlane.f32.xlu0 %v171
    %v173 = vpop.xlane.xlu0 %172
    %v174 = vlog2.pop %v170
    %v175 = vmul.f32 %v174, 0.6931472
    %v176 = vlog2.pop %v173
    %v177 = vmul.f32 %v176, 0.6931472
    %v178 = vsub.f32 %v162, %v175
    %v179 = vsub.f32 %v163, %v177
    %180 = vst.msk [vmem:[#allocation2] sm:$0xff] %vm155, %v178
    %181 = vst.msk [vmem:[#allocation2 + $0x8] sm:$0xff] %vm155, %v179
    // Predicated region
    $region22: #{qrnn_model_forward.9} parent=1 // pred_check
      _
    $region23: #{qrnn_model_forward.9} parent=1 // pred_check_branch
      %183 = sbr.rel (0) target = $region25
    $region24: #{qrnn_model_forward.9} parent=1 // pred_region
      %s185 = ssub.s32 256, 256
      %186 = vsyncadd [#allocation3], %s185
      %s187 = sshll.u32 [#allocation2], 4
      %s188 = int_to_ptr.vmem [resolvable:$true] %s187
      %193 = dma.vmem_to_hbm [thread:$0]  %s188, 256, %s5, [#allocation3], 128, 128, 8
    $region25: #{qrnn_model_forward.9} parent=1 // pred_fallthru
      _
    // Predicated region
    $region26: #{qrnn_model_forward.9} parent=1 // pred_check
      _
    $region27: #{qrnn_model_forward.9} parent=1 // pred_check_branch
      %195 = sbr.rel (0) target = $region29
    $region28: #{qrnn_model_forward.9} parent=1 // pred_region
      %196 = dma.done [#allocation3], 256
    $region29: #{qrnn_model_forward.9} parent=1 // pred_fallthru
      _
    %197 = vsyncpa [#allocation3], 1

</llo_original>
